<compile_context>
chip_gen: v7x
topology: tpu7x:2x2x1
jax: 0.10.0
libtpu: 0.0.40
codegen_flags: <defaults>
</compile_context>

<pallas_src>
import math

import numpy as np
import jax
import jax.numpy as jnp
from jax.experimental import pallas as pl
from jax.experimental.pallas import tpu as pltpu

HIDDEN = 32    # hidden_layer_size
NMODES = 10    # nModes of the Rational activation
DEGREE = 3     # polynomial degree -> 3*DEGREE input features


def _round_up(a, b):
    return ((a + b - 1) // b) * b


# ----------------------------------------------------------------------------
# MannEddyLifetime:  tau(kL) = kL^(-2/3) / sqrt( 2F1(1/3, 17/6; 4/3; -kL^-2) )
#
# Device-side f32 evaluation, two regimes so the Gauss-series argument is
# always <= 1/2 (32 terms give f32 accuracy for all kL > 0):
#   kL >= 1 (x = kL^2 >= 1):  Pfaff transform
#       F = (x/(1+x))^(1/3) * 2F1(1/3, -3/2; 4/3; 1/(1+x))
#   kL <  1:  z -> 1/z connection formula (first term closes since a-c+1 = 0)
#             followed by a Pfaff transform on the remaining 2F1:
#       F = x^(1/3) * ( C1 + C2 * (x/(1+x))^(5/2) * 2F1(2/3, 5/2; 7/2; x/(1+x)) )
#   with C1 = G(4/3)G(5/2)/G(17/6),  C2 = G(4/3)G(-5/2)/(G(1/3)G(-3/2)) = -2/15.
# ----------------------------------------------------------------------------
_C1 = math.gamma(4.0 / 3.0) * math.gamma(2.5) / math.gamma(17.0 / 6.0)
_C2 = math.gamma(4.0 / 3.0) * math.gamma(-2.5) / (math.gamma(1.0 / 3.0) *
                                                  math.gamma(-1.5))  # == -2/15


def _hyp_series(a, b, c, w, n_terms):
    """sum_{n>=0} (a)_n (b)_n / ((c)_n n!) w^n   (f32, elementwise in w)."""
    a = jnp.float32(a)
    b = jnp.float32(b)
    c = jnp.float32(c)

    def body(n, carry):
        term, total = carry
        nf = n.astype(jnp.float32)
        term = term * ((a + nf) * (b + nf) / ((c + nf) * (nf + 1.0))) * w
        return term, total + term

    ones = jnp.ones_like(w)
    _, s = jax.lax.fori_loop(0, n_terms, body, (ones, ones))
    return s


def mann_eddy_lifetime_jnp(kL, n_terms=32):
    kL = kL.astype(jnp.float32)
    x = kL * kL                                  # x = kL^2,  z = -1/x
    wA = x / (1.0 + x)                           # series arg, <= 1/2 for kL < 1
    wB = 1.0 / (1.0 + x)                         # series arg, <= 1/2 for kL >= 1
    sA = _hyp_series(2.0 / 3.0, 2.5, 3.5, wA, n_terms)
    sB = _hyp_series(1.0 / 3.0, -1.5, 4.0 / 3.0, wB, n_terms)
    cbrt_x = jnp.cbrt(x)
    FA = cbrt_x * (jnp.float32(_C1) +
                   jnp.float32(_C2) * wA * wA * jnp.sqrt(wA) * sA)
    FB = jnp.cbrt(wA) * sB
    F = jnp.where(kL >= 1.0, FB, FA)
    # kL^(-2/3) = 1/cbrt(x)
    return jax.lax.rsqrt(F) / cbrt_x


# ----------------------------------------------------------------------------
# Pallas kernel
# ----------------------------------------------------------------------------
def _taunet_kernel(kin_ref, base_ref, w0_ref, w1_ref, w2_ref, w3_ref,
                   poles2_ref, rw_ref, out_ref, x_ref):
    kf = kin_ref[...]                       # (8, TN) f32: rows 0-2 = k, 3-7 = pad
    k2 = kf * kf
    # Build [k, k^2, k^3] as 24 sublane-ALIGNED rows in a VMEM scratch; the
    # fc0 weight has zero columns for the 5 pad rows of each power group.
    x_ref[0:8, :] = kf
    x_ref[8:16, :] = k2
    x_ref[16:24, :] = k2 * kf

    # fc0 fused into a single K=24 matmul, then fc1 / fc2, all f32 on the MXU.
    h = jnp.maximum(jnp.dot(w0_ref[...], x_ref[...],
                            preferred_element_type=jnp.float32), 0.0)   # (H, TN)
    h = jnp.maximum(jnp.dot(w1_ref[...], h,
                            preferred_element_type=jnp.float32), 0.0)   # (H, TN)
    h = jnp.maximum(jnp.dot(w2_ref[...], h,
                            preferred_element_type=jnp.float32), 0.0)   # (H, TN)

    # fc3 with a block-"diagonal" weight: row g of y = w3 . h[:, g*C:(g+1)*C].
    # This lands the scalar channel directly in a sublane-dense (8, C) layout
    # (no (1, TN) vregs, no cross-lane reshape, dense HBM output block).
    C = out_ref.shape[-1]
    y = jnp.dot(w3_ref[0], h[:, 0:C], preferred_element_type=jnp.float32)
    for g in range(1, 8):
        y = y + jnp.dot(w3_ref[g], h[:, g * C:(g + 1) * C],
                        preferred_element_type=jnp.float32)
    y = jnp.maximum(y, 0.0)                 # ReLU after fc3
    ay = jnp.abs(y)

    # Rational activation: sum_m w_m / (|y| + poles_m^2).  Scalars live in
    # SMEM; reciprocals ride the EUP slot.  poles[0] == 0 reproduces the torch
    # module's divide-by-zero behaviour when y == 0.
    r = jnp.zeros_like(ay)
    for m in range(NMODES):
        r = r + rw_ref[m] * pl.reciprocal(ay + poles2_ref[m], approx=True)

    out_ref[...] = r + base_ref[...]


def taunet_forward(k, kL, params, *, tile_n=16384):
    """k: (N, 3) float32, kL: (N, 1).  Returns (N, 1) float32.

    params use the torch nn.Linear (out, in) layout:
      w0 (H, 9), w1 (H, H), w2 (H, H), w3 (1, H), poles (NMODES,), rw (NMODES,)
    """
    w0, w1, w2, w3, poles, rw = params
    N = k.shape[0]

    # --- tiling: batch on lanes; tn must be a multiple of 1024 so the dense
    # scalar channel (8, tn//8) keeps a 128-multiple lane width.  Large tiles
    # amortize the ~0.35 us per-grid-step overhead; capped at 32K so VMEM use
    # stays well inside the 48 MiB limit requested below (safe on v5e/v6e/v7x,
    # and leaves >= 2 grid steps for the v7x dual-TC split at large N).
    tile_n = int(min(max(_round_up(int(tile_n), 1024), 1024), 32768))
    tn = min(tile_n, _round_up(N, 1024))
    n_pad = _round_up(N, tn)
    n_tiles = n_pad // tn
    c = tn // 8

    # --- host-side parameter prep (tiny, once per call) ---------------------
    # torch feature order: [k1, k1^2, k1^3, k2, k2^2, k2^3, k3, k3^2, k3^3].
    # Regroup by power and zero-pad to match the 24-row in-kernel feature
    # stack [k(8 rows), k^2(8 rows), k^3(8 rows)].
    w0f = jnp.asarray(w0, jnp.float32)                        # (H, 9)
    zpad = jnp.zeros((HIDDEN, 5), jnp.float32)
    w0p = jnp.concatenate([w0f[:, 0::3], zpad,                # power 1: k1,k2,k3
                           w0f[:, 1::3], zpad,                # power 2
                           w0f[:, 2::3], zpad], axis=1)       # power 3 -> (H, 24)
    w1f = jnp.asarray(w1, jnp.float32)                        # (H, H)
    w2f = jnp.asarray(w2, jnp.float32)                        # (H, H)
    # Block-diagonal fc3 weight: w3blk[g, r, :] = (r == g) * w3
    w3v = jnp.asarray(w3, jnp.float32).reshape(1, 1, HIDDEN)
    w3blk = jnp.eye(8, dtype=jnp.float32).reshape(8, 8, 1) * w3v   # (8, 8, H)
    poles2 = (jnp.asarray(poles, jnp.float32) ** 2).reshape(NMODES)
    rwf = jnp.asarray(rw, jnp.float32).reshape(NMODES)

    # --- inputs: k feature-major (8-row padded), base/out sublane-dense -----
    kin = jnp.full((8, n_pad), 1.0, jnp.float32)              # pad rows/tail = 1.0
    kin = kin.at[0:3, :N].set(jnp.asarray(k, jnp.float32).T)

    kLp = jnp.pad(jnp.asarray(kL, jnp.float32).reshape(N),
                  (0, n_pad - N), constant_values=1.0)
    # kk = k1^2 + k2^2 + k3^2 is dead code in the torch forward -> skipped.
    base = mann_eddy_lifetime_jnp(kLp).reshape(n_pad // c, c)  # dense (8*tiles, c)

    out = pl.pallas_call(
        _taunet_kernel,
        out_shape=jax.ShapeDtypeStruct((n_pad // c, c), jnp.float32),
        grid_spec=pltpu.PrefetchScalarGridSpec(
            num_scalar_prefetch=0,
            grid=(n_tiles,),
            in_specs=[
                pl.BlockSpec((8, tn), lambda i: (0, i)),             # k (padded rows)
                pl.BlockSpec((8, c), lambda i: (i, 0)),              # base (dense)
                pl.BlockSpec((HIDDEN, 24), lambda i: (0, 0)),        # fused fc0 W
                pl.BlockSpec((HIDDEN, HIDDEN), lambda i: (0, 0)),    # fc1 W
                pl.BlockSpec((HIDDEN, HIDDEN), lambda i: (0, 0)),    # fc2 W
                pl.BlockSpec((8, 8, HIDDEN), lambda i: (0, 0, 0)),   # fc3 block-diag W
                pl.BlockSpec(memory_space=pltpu.MemorySpace.SMEM),   # poles^2
                pl.BlockSpec(memory_space=pltpu.MemorySpace.SMEM),   # rational weights
            ],
            out_specs=pl.BlockSpec((8, c), lambda i: (i, 0)),        # dense output
            scratch_shapes=[pltpu.VMEM((24, tn), jnp.float32)],      # [k,k^2,k^3]
        ),
        compiler_params=pltpu.CompilerParams(
            dimension_semantics=("parallel",),          # independent tiles
            vmem_limit_bytes=48 * 1024 * 1024,          # large tiles on v5e too
        ),
    )(kin, base, w0p, w1f, w2f, w3blk, poles2, rwf)

    return out.reshape(-1)[:N].reshape(N, 1)


# ----------------------------------------------------------------------------
# Pure-JAX reference (f32, torch layout/feature order) and test harness
# ----------------------------------------------------------------------------
def taunet_reference(k, kL, params):
    w0, w1, w2, w3, poles, rw = params
    N = k.shape[0]
    power = jnp.arange(1, DEGREE + 1, dtype=jnp.float32)
    x = (k.astype(jnp.float32)[..., None] ** power).reshape(N, 3 * DEGREE)
    hp = jax.lax.Precision.HIGHEST
    h = jnp.maximum(jnp.dot(x, w0.T, precision=hp), 0.0)
    h = jnp.maximum(jnp.dot(h, w1.T, precision=hp), 0.0)
    h = jnp.maximum(jnp.dot(h, w2.T, precision=hp), 0.0)
    y = jnp.maximum(jnp.dot(h, w3.T, precision=hp), 0.0)     # (N, 1)
    den = jnp.abs(y) + poles.reshape(1, -1) ** 2
    r = jnp.sum(rw.reshape(1, -1) / den, axis=-1, keepdims=True)
    base = mann_eddy_lifetime_jnp(kL.reshape(N)).reshape(N, 1)
    return r + base


def init_params(key):
    k0, k1, k2, k3, kr = jax.random.split(key, 5)
    # Positive weights keep the pre-Rational output strictly positive so the
    # zero pole (poles[0] == 0, as in torch.linspace(0, 100, nModes)) never
    # divides by zero in this synthetic test.
    w0 = jnp.abs(jax.random.normal(k0, (HIDDEN, 3 * DEGREE), jnp.float32)) * 0.3
    w1 = jnp.abs(jax.random.normal(k1, (HIDDEN, HIDDEN), jnp.float32)) * 0.3
    w2 = jnp.abs(jax.random.normal(k2, (HIDDEN, HIDDEN), jnp.float32)) * 0.3
    w3 = jnp.abs(jax.random.normal(k3, (1, HIDDEN), jnp.float32)) * 0.3
    poles = jnp.linspace(0.0, 100.0, NMODES, dtype=jnp.float32)
    rw = jax.random.normal(kr, (NMODES,), jnp.float32) * 0.5
    return (w0, w1, w2, w3, poles, rw)


if __name__ == "__main__":
    key = jax.random.PRNGKey(0)
    pkey, kkey, lkey = jax.random.split(key, 3)

    params = init_params(pkey)

    N = 2500  # deliberately ragged; pads to 3072 on the lane axis
    k = jax.random.uniform(kkey, (N, 3), jnp.float32, minval=0.5, maxval=2.0)
    kL = jax.random.uniform(lkey, (N, 1), jnp.float32, minval=0.5, maxval=3.0)

    ref = jax.block_until_ready(taunet_reference(k, kL, params))

    # Multi-tile path (3 grid steps, c = 128).
    out_small = jax.block_until_ready(taunet_forward(k, kL, params, tile_n=1024))
    np.testing.assert_allclose(np.asarray(out_small), np.asarray(ref),
                               rtol=2e-2, atol=1e-3)

    # Default large-tile path (single step here, c = 384).
    out = jax.block_until_ready(taunet_forward(k, kL, params))
    np.testing.assert_allclose(np.asarray(out), np.asarray(ref),
                               rtol=2e-2, atol=1e-3)

    assert out.shape == (N, 1)
    print("KERNEL_OK")
</pallas_src>

<mosaic_0001>
module attributes {stable_mosaic.version = 11 : i64} {
  func.func @_taunet_kernel(%arg0: i32, %arg1: memref<8x1024xf32, #tpu.memory_space<vmem>>, %arg2: memref<8x128xf32, #tpu.memory_space<vmem>>, %arg3: memref<32x24xf32, #tpu.memory_space<vmem>>, %arg4: memref<32x32xf32, #tpu.memory_space<vmem>>, %arg5: memref<32x32xf32, #tpu.memory_space<vmem>>, %arg6: memref<8x8x32xf32, #tpu.memory_space<vmem>>, %arg7: memref<10xf32, #tpu.memory_space<smem>>, %arg8: memref<10xf32, #tpu.memory_space<smem>>, %arg9: memref<8x128xf32, #tpu.memory_space<vmem>>, %arg10: memref<24x1024xf32, #tpu.memory_space<vmem>>) attributes {dimension_semantics = [#tpu.dimension_semantics<parallel>], iteration_bounds = array<i64: 3>, scalar_prefetch = 0 : i64, scratch_operands = 1 : i64, tpu.core_type = #tpu.core_type<tc>, window_params = [{transform_indices = @transform_0, window_bounds = array<i64: 8, 1024>}, {transform_indices = @transform_1, window_bounds = array<i64: 8, 128>}, {pipeline_mode = #tpu.pipeline_mode<synchronous>, transform_indices = @transform_2, window_bounds = array<i64: 32, 24>}, {pipeline_mode = #tpu.pipeline_mode<synchronous>, transform_indices = @transform_3, window_bounds = array<i64: 32, 32>}, {pipeline_mode = #tpu.pipeline_mode<synchronous>, transform_indices = @transform_4, window_bounds = array<i64: 32, 32>}, {pipeline_mode = #tpu.pipeline_mode<synchronous>, transform_indices = @transform_5, window_bounds = array<i64: 8, 8, 32>}, {transform_indices = @transform_6, window_bounds = array<i64: 10>}, {transform_indices = @transform_7, window_bounds = array<i64: 10>}, {transform_indices = @transform_8, window_bounds = array<i64: 8, 128>}]} {
    %c0 = arith.constant 0 : index
    %c0_0 = arith.constant 0 : index
    %0 = vector.load %arg1[%c0, %c0_0] : memref<8x1024xf32, #tpu.memory_space<vmem>>, vector<8x1024xf32>
    %1 = arith.mulf %0, %0 : vector<8x1024xf32>
    %c0_1 = arith.constant 0 : index
    %c0_2 = arith.constant 0 : index
    %2 = vector.load %arg10[%c0_1, %c0_2] : memref<24x1024xf32, #tpu.memory_space<vmem>>, vector<8x1024xf32>
    tpu.vector_store %arg10[%c0_1, %c0_2], %0 {strides = array<i32>} : memref<24x1024xf32, #tpu.memory_space<vmem>>, vector<8x1024xf32>,
    %c8 = arith.constant 8 : index
    %c0_3 = arith.constant 0 : index
    %3 = vector.load %arg10[%c8, %c0_3] : memref<24x1024xf32, #tpu.memory_space<vmem>>, vector<8x1024xf32>
    tpu.vector_store %arg10[%c8, %c0_3], %1 {strides = array<i32>} : memref<24x1024xf32, #tpu.memory_space<vmem>>, vector<8x1024xf32>,
    %4 = arith.mulf %1, %0 : vector<8x1024xf32>
    %c16 = arith.constant 16 : index
    %c0_4 = arith.constant 0 : index
    %5 = vector.load %arg10[%c16, %c0_4] : memref<24x1024xf32, #tpu.memory_space<vmem>>, vector<8x1024xf32>
    tpu.vector_store %arg10[%c16, %c0_4], %4 {strides = array<i32>} : memref<24x1024xf32, #tpu.memory_space<vmem>>, vector<8x1024xf32>,
    %c0_5 = arith.constant 0 : index
    %c0_6 = arith.constant 0 : index
    %6 = vector.load %arg3[%c0_5, %c0_6] : memref<32x24xf32, #tpu.memory_space<vmem>>, vector<32x24xf32>
    %c0_7 = arith.constant 0 : index
    %c0_8 = arith.constant 0 : index
    %7 = vector.load %arg10[%c0_7, %c0_8] : memref<24x1024xf32, #tpu.memory_space<vmem>>, vector<24x1024xf32>
    %cst = arith.constant dense<0.000000e+00> : vector<32x1024xf32>
    %8 = tpu.matmul %6, %7, %cst {dimension_numbers = #tpu.dot_dimension_numbers<[1], [0], [0], [1], [0, 0, 1, 1], [], []>} : vector<32x24xf32>, vector<24x1024xf32>, vector<32x1024xf32> -> vector<32x1024xf32>
    %cst_9 = arith.constant 0.000000e+00 : f32
    %9 = vector.broadcast %cst_9 : f32 to vector<32x1024xf32>
    %10 = arith.maximumf %8, %9 : vector<32x1024xf32>
    %c0_10 = arith.constant 0 : index
    %c0_11 = arith.constant 0 : index
    %11 = vector.load %arg4[%c0_10, %c0_11] : memref<32x32xf32, #tpu.memory_space<vmem>>, vector<32x32xf32>
    %cst_12 = arith.constant dense<0.000000e+00> : vector<32x1024xf32>
    %12 = tpu.matmul %11, %10, %cst_12 {dimension_numbers = #tpu.dot_dimension_numbers<[1], [0], [0], [1], [0, 0, 1, 1], [], []>} : vector<32x32xf32>, vector<32x1024xf32>, vector<32x1024xf32> -> vector<32x1024xf32>
    %cst_13 = arith.constant 0.000000e+00 : f32
    %13 = vector.broadcast %cst_13 : f32 to vector<32x1024xf32>
    %14 = arith.maximumf %12, %13 : vector<32x1024xf32>
    %c0_14 = arith.constant 0 : index
    %c0_15 = arith.constant 0 : index
    %15 = vector.load %arg5[%c0_14, %c0_15] : memref<32x32xf32, #tpu.memory_space<vmem>>, vector<32x32xf32>
    %cst_16 = arith.constant dense<0.000000e+00> : vector<32x1024xf32>
    %16 = tpu.matmul %15, %14, %cst_16 {dimension_numbers = #tpu.dot_dimension_numbers<[1], [0], [0], [1], [0, 0, 1, 1], [], []>} : vector<32x32xf32>, vector<32x1024xf32>, vector<32x1024xf32> -> vector<32x1024xf32>
    %cst_17 = arith.constant 0.000000e+00 : f32
    %17 = vector.broadcast %cst_17 : f32 to vector<32x1024xf32>
    %18 = arith.maximumf %16, %17 : vector<32x1024xf32>
    %c0_18 = arith.constant 0 : index
    %c0_19 = arith.constant 0 : index
    %c0_20 = arith.constant 0 : index
    %19 = vector.load %arg6[%c0_18, %c0_19, %c0_20] : memref<8x8x32xf32, #tpu.memory_space<vmem>>, vector<1x8x32xf32>
    %20 = vector.shape_cast %19 : vector<1x8x32xf32> to vector<8x32xf32>
    %21 = vector.extract_strided_slice %18 {offsets = [0, 0], sizes = [32, 128], strides = [1, 1]} : vector<32x1024xf32> to vector<32x128xf32>
    %cst_21 = arith.constant dense<0.000000e+00> : vector<8x128xf32>
    %22 = tpu.matmul %20, %21, %cst_21 {dimension_numbers = #tpu.dot_dimension_numbers<[1], [0], [0], [1], [0, 0, 1, 1], [], []>} : vector<8x32xf32>, vector<32x128xf32>, vector<8x128xf32> -> vector<8x128xf32>
    %c1 = arith.constant 1 : index
    %c0_22 = arith.constant 0 : index
    %c0_23 = arith.constant 0 : index
    %23 = vector.load %arg6[%c1, %c0_22, %c0_23] : memref<8x8x32xf32, #tpu.memory_space<vmem>>, vector<1x8x32xf32>
    %24 = vector.shape_cast %23 : vector<1x8x32xf32> to vector<8x32xf32>
    %25 = vector.extract_strided_slice %18 {offsets = [0, 128], sizes = [32, 128], strides = [1, 1]} : vector<32x1024xf32> to vector<32x128xf32>
    %cst_24 = arith.constant dense<0.000000e+00> : vector<8x128xf32>
    %26 = tpu.matmul %24, %25, %cst_24 {dimension_numbers = #tpu.dot_dimension_numbers<[1], [0], [0], [1], [0, 0, 1, 1], [], []>} : vector<8x32xf32>, vector<32x128xf32>, vector<8x128xf32> -> vector<8x128xf32>
    %27 = arith.addf %22, %26 : vector<8x128xf32>
    %c2 = arith.constant 2 : index
    %c0_25 = arith.constant 0 : index
    %c0_26 = arith.constant 0 : index
    %28 = vector.load %arg6[%c2, %c0_25, %c0_26] : memref<8x8x32xf32, #tpu.memory_space<vmem>>, vector<1x8x32xf32>
    %29 = vector.shape_cast %28 : vector<1x8x32xf32> to vector<8x32xf32>
    %30 = vector.extract_strided_slice %18 {offsets = [0, 256], sizes = [32, 128], strides = [1, 1]} : vector<32x1024xf32> to vector<32x128xf32>
    %cst_27 = arith.constant dense<0.000000e+00> : vector<8x128xf32>
    %31 = tpu.matmul %29, %30, %cst_27 {dimension_numbers = #tpu.dot_dimension_numbers<[1], [0], [0], [1], [0, 0, 1, 1], [], []>} : vector<8x32xf32>, vector<32x128xf32>, vector<8x128xf32> -> vector<8x128xf32>
    %32 = arith.addf %27, %31 : vector<8x128xf32>
    %c3 = arith.constant 3 : index
    %c0_28 = arith.constant 0 : index
    %c0_29 = arith.constant 0 : index
    %33 = vector.load %arg6[%c3, %c0_28, %c0_29] : memref<8x8x32xf32, #tpu.memory_space<vmem>>, vector<1x8x32xf32>
    %34 = vector.shape_cast %33 : vector<1x8x32xf32> to vector<8x32xf32>
    %35 = vector.extract_strided_slice %18 {offsets = [0, 384], sizes = [32, 128], strides = [1, 1]} : vector<32x1024xf32> to vector<32x128xf32>
    %cst_30 = arith.constant dense<0.000000e+00> : vector<8x128xf32>
    %36 = tpu.matmul %34, %35, %cst_30 {dimension_numbers = #tpu.dot_dimension_numbers<[1], [0], [0], [1], [0, 0, 1, 1], [], []>} : vector<8x32xf32>, vector<32x128xf32>, vector<8x128xf32> -> vector<8x128xf32>
    %37 = arith.addf %32, %36 : vector<8x128xf32>
    %c4 = arith.constant 4 : index
    %c0_31 = arith.constant 0 : index
    %c0_32 = arith.constant 0 : index
    %38 = vector.load %arg6[%c4, %c0_31, %c0_32] : memref<8x8x32xf32, #tpu.memory_space<vmem>>, vector<1x8x32xf32>
    %39 = vector.shape_cast %38 : vector<1x8x32xf32> to vector<8x32xf32>
    %40 = vector.extract_strided_slice %18 {offsets = [0, 512], sizes = [32, 128], strides = [1, 1]} : vector<32x1024xf32> to vector<32x128xf32>
    %cst_33 = arith.constant dense<0.000000e+00> : vector<8x128xf32>
    %41 = tpu.matmul %39, %40, %cst_33 {dimension_numbers = #tpu.dot_dimension_numbers<[1], [0], [0], [1], [0, 0, 1, 1], [], []>} : vector<8x32xf32>, vector<32x128xf32>, vector<8x128xf32> -> vector<8x128xf32>
    %42 = arith.addf %37, %41 : vector<8x128xf32>
    %c5 = arith.constant 5 : index
    %c0_34 = arith.constant 0 : index
    %c0_35 = arith.constant 0 : index
    %43 = vector.load %arg6[%c5, %c0_34, %c0_35] : memref<8x8x32xf32, #tpu.memory_space<vmem>>, vector<1x8x32xf32>
    %44 = vector.shape_cast %43 : vector<1x8x32xf32> to vector<8x32xf32>
    %45 = vector.extract_strided_slice %18 {offsets = [0, 640], sizes = [32, 128], strides = [1, 1]} : vector<32x1024xf32> to vector<32x128xf32>
    %cst_36 = arith.constant dense<0.000000e+00> : vector<8x128xf32>
    %46 = tpu.matmul %44, %45, %cst_36 {dimension_numbers = #tpu.dot_dimension_numbers<[1], [0], [0], [1], [0, 0, 1, 1], [], []>} : vector<8x32xf32>, vector<32x128xf32>, vector<8x128xf32> -> vector<8x128xf32>
    %47 = arith.addf %42, %46 : vector<8x128xf32>
    %c6 = arith.constant 6 : index
    %c0_37 = arith.constant 0 : index
    %c0_38 = arith.constant 0 : index
    %48 = vector.load %arg6[%c6, %c0_37, %c0_38] : memref<8x8x32xf32, #tpu.memory_space<vmem>>, vector<1x8x32xf32>
    %49 = vector.shape_cast %48 : vector<1x8x32xf32> to vector<8x32xf32>
    %50 = vector.extract_strided_slice %18 {offsets = [0, 768], sizes = [32, 128], strides = [1, 1]} : vector<32x1024xf32> to vector<32x128xf32>
    %cst_39 = arith.constant dense<0.000000e+00> : vector<8x128xf32>
    %51 = tpu.matmul %49, %50, %cst_39 {dimension_numbers = #tpu.dot_dimension_numbers<[1], [0], [0], [1], [0, 0, 1, 1], [], []>} : vector<8x32xf32>, vector<32x128xf32>, vector<8x128xf32> -> vector<8x128xf32>
    %52 = arith.addf %47, %51 : vector<8x128xf32>
    %c7 = arith.constant 7 : index
    %c0_40 = arith.constant 0 : index
    %c0_41 = arith.constant 0 : index
    %53 = vector.load %arg6[%c7, %c0_40, %c0_41] : memref<8x8x32xf32, #tpu.memory_space<vmem>>, vector<1x8x32xf32>
    %54 = vector.shape_cast %53 : vector<1x8x32xf32> to vector<8x32xf32>
    %55 = vector.extract_strided_slice %18 {offsets = [0, 896], sizes = [32, 128], strides = [1, 1]} : vector<32x1024xf32> to vector<32x128xf32>
    %cst_42 = arith.constant dense<0.000000e+00> : vector<8x128xf32>
    %56 = tpu.matmul %54, %55, %cst_42 {dimension_numbers = #tpu.dot_dimension_numbers<[1], [0], [0], [1], [0, 0, 1, 1], [], []>} : vector<8x32xf32>, vector<32x128xf32>, vector<8x128xf32> -> vector<8x128xf32>
    %57 = arith.addf %52, %56 : vector<8x128xf32>
    %cst_43 = arith.constant 0.000000e+00 : f32
    %58 = vector.broadcast %cst_43 : f32 to vector<8x128xf32>
    %59 = arith.maximumf %57, %58 : vector<8x128xf32>
    %60 = math.absf %59 : vector<8x128xf32>
    %cst_44 = arith.constant 0.000000e+00 : f32
    %61 = vector.broadcast %cst_44 : f32 to vector<8x128xf32>
    %c0_45 = arith.constant 0 : index
    %62 = memref.load %arg8[%c0_45] : memref<10xf32, #tpu.memory_space<smem>>
    %c0_46 = arith.constant 0 : index
    %63 = memref.load %arg7[%c0_46] : memref<10xf32, #tpu.memory_space<smem>>
    %64 = vector.broadcast %63 : f32 to vector<8x128xf32>
    %65 = arith.addf %60, %64 : vector<8x128xf32>
    %66 = tpu.reciprocal %65 {approx = true} : vector<8x128xf32> -> vector<8x128xf32>
    %67 = vector.broadcast %62 : f32 to vector<8x128xf32>
    %68 = arith.mulf %67, %66 : vector<8x128xf32>
    %69 = arith.addf %61, %68 : vector<8x128xf32>
    %c1_47 = arith.constant 1 : index
    %70 = memref.load %arg8[%c1_47] : memref<10xf32, #tpu.memory_space<smem>>
    %c1_48 = arith.constant 1 : index
    %71 = memref.load %arg7[%c1_48] : memref<10xf32, #tpu.memory_space<smem>>
    %72 = vector.broadcast %71 : f32 to vector<8x128xf32>
    %73 = arith.addf %60, %72 : vector<8x128xf32>
    %74 = tpu.reciprocal %73 {approx = true} : vector<8x128xf32> -> vector<8x128xf32>
    %75 = vector.broadcast %70 : f32 to vector<8x128xf32>
    %76 = arith.mulf %75, %74 : vector<8x128xf32>
    %77 = arith.addf %69, %76 : vector<8x128xf32>
    %c2_49 = arith.constant 2 : index
    %78 = memref.load %arg8[%c2_49] : memref<10xf32, #tpu.memory_space<smem>>
    %c2_50 = arith.constant 2 : index
    %79 = memref.load %arg7[%c2_50] : memref<10xf32, #tpu.memory_space<smem>>
    %80 = vector.broadcast %79 : f32 to vector<8x128xf32>
    %81 = arith.addf %60, %80 : vector<8x128xf32>
    %82 = tpu.reciprocal %81 {approx = true} : vector<8x128xf32> -> vector<8x128xf32>
    %83 = vector.broadcast %78 : f32 to vector<8x128xf32>
    %84 = arith.mulf %83, %82 : vector<8x128xf32>
    %85 = arith.addf %77, %84 : vector<8x128xf32>
    %c3_51 = arith.constant 3 : index
    %86 = memref.load %arg8[%c3_51] : memref<10xf32, #tpu.memory_space<smem>>
    %c3_52 = arith.constant 3 : index
    %87 = memref.load %arg7[%c3_52] : memref<10xf32, #tpu.memory_space<smem>>
    %88 = vector.broadcast %87 : f32 to vector<8x128xf32>
    %89 = arith.addf %60, %88 : vector<8x128xf32>
    %90 = tpu.reciprocal %89 {approx = true} : vector<8x128xf32> -> vector<8x128xf32>
    %91 = vector.broadcast %86 : f32 to vector<8x128xf32>
    %92 = arith.mulf %91, %90 : vector<8x128xf32>
    %93 = arith.addf %85, %92 : vector<8x128xf32>
    %c4_53 = arith.constant 4 : index
    %94 = memref.load %arg8[%c4_53] : memref<10xf32, #tpu.memory_space<smem>>
    %c4_54 = arith.constant 4 : index
    %95 = memref.load %arg7[%c4_54] : memref<10xf32, #tpu.memory_space<smem>>
    %96 = vector.broadcast %95 : f32 to vector<8x128xf32>
    %97 = arith.addf %60, %96 : vector<8x128xf32>
    %98 = tpu.reciprocal %97 {approx = true} : vector<8x128xf32> -> vector<8x128xf32>
    %99 = vector.broadcast %94 : f32 to vector<8x128xf32>
    %100 = arith.mulf %99, %98 : vector<8x128xf32>
    %101 = arith.addf %93, %100 : vector<8x128xf32>
    %c5_55 = arith.constant 5 : index
    %102 = memref.load %arg8[%c5_55] : memref<10xf32, #tpu.memory_space<smem>>
    %c5_56 = arith.constant 5 : index
    %103 = memref.load %arg7[%c5_56] : memref<10xf32, #tpu.memory_space<smem>>
    %104 = vector.broadcast %103 : f32 to vector<8x128xf32>
    %105 = arith.addf %60, %104 : vector<8x128xf32>
    %106 = tpu.reciprocal %105 {approx = true} : vector<8x128xf32> -> vector<8x128xf32>
    %107 = vector.broadcast %102 : f32 to vector<8x128xf32>
    %108 = arith.mulf %107, %106 : vector<8x128xf32>
    %109 = arith.addf %101, %108 : vector<8x128xf32>
    %c6_57 = arith.constant 6 : index
    %110 = memref.load %arg8[%c6_57] : memref<10xf32, #tpu.memory_space<smem>>
    %c6_58 = arith.constant 6 : index
    %111 = memref.load %arg7[%c6_58] : memref<10xf32, #tpu.memory_space<smem>>
    %112 = vector.broadcast %111 : f32 to vector<8x128xf32>
    %113 = arith.addf %60, %112 : vector<8x128xf32>
    %114 = tpu.reciprocal %113 {approx = true} : vector<8x128xf32> -> vector<8x128xf32>
    %115 = vector.broadcast %110 : f32 to vector<8x128xf32>
    %116 = arith.mulf %115, %114 : vector<8x128xf32>
    %117 = arith.addf %109, %116 : vector<8x128xf32>
    %c7_59 = arith.constant 7 : index
    %118 = memref.load %arg8[%c7_59] : memref<10xf32, #tpu.memory_space<smem>>
    %c7_60 = arith.constant 7 : index
    %119 = memref.load %arg7[%c7_60] : memref<10xf32, #tpu.memory_space<smem>>
    %120 = vector.broadcast %119 : f32 to vector<8x128xf32>
    %121 = arith.addf %60, %120 : vector<8x128xf32>
    %122 = tpu.reciprocal %121 {approx = true} : vector<8x128xf32> -> vector<8x128xf32>
    %123 = vector.broadcast %118 : f32 to vector<8x128xf32>
    %124 = arith.mulf %123, %122 : vector<8x128xf32>
    %125 = arith.addf %117, %124 : vector<8x128xf32>
    %c8_61 = arith.constant 8 : index
    %126 = memref.load %arg8[%c8_61] : memref<10xf32, #tpu.memory_space<smem>>
    %c8_62 = arith.constant 8 : index
    %127 = memref.load %arg7[%c8_62] : memref<10xf32, #tpu.memory_space<smem>>
    %128 = vector.broadcast %127 : f32 to vector<8x128xf32>
    %129 = arith.addf %60, %128 : vector<8x128xf32>
    %130 = tpu.reciprocal %129 {approx = true} : vector<8x128xf32> -> vector<8x128xf32>
    %131 = vector.broadcast %126 : f32 to vector<8x128xf32>
    %132 = arith.mulf %131, %130 : vector<8x128xf32>
    %133 = arith.addf %125, %132 : vector<8x128xf32>
    %c9 = arith.constant 9 : index
    %134 = memref.load %arg8[%c9] : memref<10xf32, #tpu.memory_space<smem>>
    %c9_63 = arith.constant 9 : index
    %135 = memref.load %arg7[%c9_63] : memref<10xf32, #tpu.memory_space<smem>>
    %136 = vector.broadcast %135 : f32 to vector<8x128xf32>
    %137 = arith.addf %60, %136 : vector<8x128xf32>
    %138 = tpu.reciprocal %137 {approx = true} : vector<8x128xf32> -> vector<8x128xf32>
    %139 = vector.broadcast %134 : f32 to vector<8x128xf32>
    %140 = arith.mulf %139, %138 : vector<8x128xf32>
    %141 = arith.addf %133, %140 : vector<8x128xf32>
    %c0_64 = arith.constant 0 : index
    %c0_65 = arith.constant 0 : index
    %142 = vector.load %arg2[%c0_64, %c0_65] : memref<8x128xf32, #tpu.memory_space<vmem>>, vector<8x128xf32>
    %143 = arith.addf %141, %142 : vector<8x128xf32>
    %c0_66 = arith.constant 0 : index
    %c0_67 = arith.constant 0 : index
    %144 = vector.load %arg9[%c0_66, %c0_67] : memref<8x128xf32, #tpu.memory_space<vmem>>, vector<8x128xf32>
    tpu.vector_store %arg9[%c0_66, %c0_67], %143 {strides = array<i32>} : memref<8x128xf32, #tpu.memory_space<vmem>>, vector<8x128xf32>,
    return
  }
  func.func @transform_0(%arg0: i32) -> (i32, i32) {
    %c0_i32 = arith.constant 0 : i32
    %c0_i32_0 = arith.constant 0 : i32
    return %c0_i32, %arg0 : i32, i32
  }
  func.func @transform_1(%arg0: i32) -> (i32, i32) {
    %c0_i32 = arith.constant 0 : i32
    %c0_i32_0 = arith.constant 0 : i32
    return %arg0, %c0_i32 : i32, i32
  }
  func.func @transform_2(%arg0: i32) -> (i32, i32) {
    %c0_i32 = arith.constant 0 : i32
    %c0_i32_0 = arith.constant 0 : i32
    %c0_i32_1 = arith.constant 0 : i32
    return %c0_i32, %c0_i32_0 : i32, i32
  }
  func.func @transform_3(%arg0: i32) -> (i32, i32) {
    %c0_i32 = arith.constant 0 : i32
    %c0_i32_0 = arith.constant 0 : i32
    %c0_i32_1 = arith.constant 0 : i32
    return %c0_i32, %c0_i32_0 : i32, i32
  }
  func.func @transform_4(%arg0: i32) -> (i32, i32) {
    %c0_i32 = arith.constant 0 : i32
    %c0_i32_0 = arith.constant 0 : i32
    %c0_i32_1 = arith.constant 0 : i32
    return %c0_i32, %c0_i32_0 : i32, i32
  }
  func.func @transform_5(%arg0: i32) -> (i32, i32, i32) {
    %c0_i32 = arith.constant 0 : i32
    %c0_i32_0 = arith.constant 0 : i32
    %c0_i32_1 = arith.constant 0 : i32
    %c0_i32_2 = arith.constant 0 : i32
    return %c0_i32, %c0_i32_0, %c0_i32_1 : i32, i32, i32
  }
  func.func @transform_6(%arg0: i32) -> i32 {
    %c0_i32 = arith.constant 0 : i32
    %c0_i32_0 = arith.constant 0 : i32
    return %c0_i32 : i32
  }
  func.func @transform_7(%arg0: i32) -> i32 {
    %c0_i32 = arith.constant 0 : i32
    %c0_i32_0 = arith.constant 0 : i32
    return %c0_i32 : i32
  }
  func.func @transform_8(%arg0: i32) -> (i32, i32) {
    %c0_i32 = arith.constant 0 : i32
    %c0_i32_0 = arith.constant 0 : i32
    return %arg0, %c0_i32 : i32, i32
  }
}

</mosaic_0001>

<llo_original>
// kernel: tpu_custom_call.1
$region0: #{tpu_custom_call.1}
  #allocation0 [shape = 'u32[]', space=smem, size = 0x4, offset = 0x4, fixed_abs, tag = 'smem constant byte address 0x4 - core index']
  #allocation1 [shape = 'u32[144,128]{1,0:T(1,128)}', space=vmem, size = 0x12000, scoped, tag = 'internal scratch']
  #allocation2 [shape = 'f32[24,1024]{1,0:T(8,128)}', space=vmem, size = 0x18000, scoped, tag = 'scratch operand']
  %s0 = inlined_call_operand.hbm [shape: f32[8,3072], index: 0, kind: input, shape index: {}]
  %s1 = inlined_call_operand.hbm [shape: f32[24,128], index: 1, kind: input, shape index: {}]
  %s2 = inlined_call_operand.vmem [shape: f32[32,24], index: 2, kind: input, shape index: {}]
  %s3 = inlined_call_operand.hbm [shape: f32[32,32], index: 3, kind: input, shape index: {}]
  %s4 = inlined_call_operand.hbm [shape: f32[32,32], index: 4, kind: input, shape index: {}]
  %s5 = inlined_call_operand.vmem [shape: f32[8,8,32], index: 5, kind: input, shape index: {}]
  %s6 = inlined_call_operand.vmem [shape: f32[10], index: 6, kind: input, shape index: {}]
  %s7 = inlined_call_operand.vmem [shape: f32[10], index: 7, kind: input, shape index: {}]
  %s8 = inlined_call_operand.hbm [shape: f32[24,128], index: 8, kind: output, shape index: {}]
  %s9 = sld [smem:[#allocation0]]
  $region89: #{tpu_custom_call.1} parent=0
    _
  %s11 = ssub.s32 1, %s9
  %s12 = scalar_select 0, %s11, %s9
  $region1: #{tpu_custom_call.1} parent=0
    #allocation3 [shape = 'u8[65536]{0}', space=vmem, size = 0x10000, scoped, tag = 'input window, operand 0']
    #allocation4 [shape = 's32[2]{0}', space=sflag, size = 0x8, scoped, tag = 'scoped memory for tpu_custom_call.1']
    #allocation5 [shape = 's32[2]{0}', space=sflag, size = 0x8, scoped, tag = 'scoped memory for tpu_custom_call.1']
    #allocation6 [shape = 's32[2]{0}', space=sflag, size = 0x8, scoped, tag = 'scoped memory for tpu_custom_call.1']
    #allocation7 [shape = 'u8[8192]{0}', space=vmem, size = 0x2000, scoped, tag = 'input window, operand 1']
    #allocation8 [shape = 's32[2]{0}', space=sflag, size = 0x8, scoped, tag = 'scoped memory for tpu_custom_call.1']
    #allocation9 [shape = 'u8[16384]{0}', space=vmem, size = 0x4000, scoped, tag = 'input window, operand 3, single buffered']
    #allocation10 [shape = 'u8[16384]{0}', space=vmem, size = 0x4000, scoped, tag = 'input window, operand 4, single buffered']
    #allocation11 [shape = 's32[1]{0}', space=sflag, size = 0x4, scoped, tag = 'scoped memory for tpu_custom_call.1']
    #allocation12 [shape = 'u8[512]{0}', space=smem, size = 0x200, scoped, tag = 'input window, operand 6, single buffered']
    #allocation13 [shape = 'u8[512]{0}', space=smem, size = 0x200, scoped, tag = 'input window, operand 7, single buffered']
    #allocation14 [shape = 's32[1]{0}', space=sflag, size = 0x4, scoped, tag = 'scoped memory for tpu_custom_call.1']
    #allocation15 [shape = 'u8[8192]{0}', space=vmem, size = 0x2000, scoped, tag = 'output window, operand 0']
    %13 = vsyncpa [#allocation4], 0
    %s14 = scalar_lea.sflag [#allocation4], 1
    %15 = vsyncpa %s14, 0
    %16 = vsyncpa [#allocation8], 0
    %s17 = scalar_lea.sflag [#allocation8], 1
    %18 = vsyncpa %s17, 0
    %19 = vsyncpa [#allocation11], 0
    %20 = vsyncpa [#allocation6], 0
    %21 = vsyncpa [#allocation14], 0
    %22 = vsyncpa [#allocation5], 0
    %s23 = scalar_lea.sflag [#allocation5], 1
    %24 = vsyncpa %s23, 0
    loop: start=0, step=1, limit=5
    $region2: #{tpu_custom_call.1} parent=1 // loop_pre_header
      _
    $region3: #{tpu_custom_call.1} parent=1 // loop_header
      %s26 = sphi 0, %s30
      %p27 = scmp.ge.s32.totalorder %s26, 5
      %s36 = sphi 0, %s38
      %s39 = sphi 0, %s36
      %s40 = sphi 0, %s39
      %s56 = sphi 0, %s40
      %s62 = sphi 0, %s64
      %s65 = sphi 0, %s62
      %s66 = sphi 0, %s65
      %s82 = sphi 0, %s66
      %s86 = sphi 0, %s86
      %s88 = sphi 0, %s86
      %s89 = sphi 0, %s88
      %s103 = sphi 0, %s89
      %s107 = sphi 0, %s107
      %s109 = sphi 0, %s107
      %s110 = sphi 0, %s109
      %s124 = sphi 0, %s110
      %s128 = sphi 0, %s128
      %s130 = sphi 0, %s128
      %s131 = sphi 0, %s130
      %s145 = sphi 0, %s131
      %s149 = sphi 0, %s149
      %s151 = sphi 0, %s149
      %s152 = sphi 0, %s151
      %s166 = sphi 0, %s152
      %s170 = sphi 0, %s170
      %s172 = sphi 0, %s170
      %s173 = sphi 0, %s172
      %s187 = sphi 0, %s173
      %s191 = sphi 0, %s191
      %s193 = sphi 0, %s191
      %s194 = sphi 0, %s193
      %s208 = sphi 0, %s194
      %s214 = sphi 0, %s216
      %s217 = sphi 0, %s214
      %s218 = sphi 0, %s217
      %s234 = sphi 0, %s218
    $region4: #{tpu_custom_call.1} parent=1 // loop_header_branch
      %29 = sbr.rel (%p27) target = $region8
    $region5: #{tpu_custom_call.1} parent=1 // loop_body
      %s31 = ssub.s32 %s26, 1
      %s32 = ssub.s32 %s26, 2
      %s33 = sadd.s32 %s26, 1
      %s34 = ssub.s32 %s26, %s33
      %p35 = scmp.eq.s32.totalorder %s34, 0
      %s37 = sadd.s32 %s36, 1
      %s38 = scalar_select %p35, %s36, %s37
      %p41 = pneg %p35
      %p42 = scmp.eq.s32.totalorder %s26, 2
      %p43 = por %p41, %p42
      %p44 = scmp.ne.s32.totalorder %s36, %s39
      %p45 = scmp.eq.s32.totalorder %s26, 0
      %p46 = por %p44, %p45
      %p47 = scmp.ne.s32.totalorder %s36, %s39
      %p48 = scmp.eq.s32.totalorder %s31, 2
      %p49 = por %p47, %p48
      %p50 = scmp.ne.s32.totalorder %s39, %s40
      %p51 = scmp.eq.s32.totalorder %s31, 0
      %p52 = por %p50, %p51
      %p53 = scmp.ne.s32.totalorder %s39, %s40
      %p54 = scmp.eq.s32.totalorder %s32, 2
      %p55 = por %p53, %p54
      %p57 = scmp.ne.s32.totalorder %s40, %s56
      %p58 = scmp.eq.s32.totalorder %s32, 0
      %p59 = por %p57, %p58
      %s60 = ssub.s32 %s26, %s33
      %p61 = scmp.eq.s32.totalorder %s60, 0
      %s63 = sadd.s32 %s62, 1
      %s64 = scalar_select %p61, %s62, %s63
      %p67 = pneg %p61
      %p68 = scmp.eq.s32.totalorder %s26, 2
      %p69 = por %p67, %p68
      %p70 = scmp.ne.s32.totalorder %s62, %s65
      %p71 = scmp.eq.s32.totalorder %s26, 0
      %p72 = por %p70, %p71
      %p73 = scmp.ne.s32.totalorder %s62, %s65
      %p74 = scmp.eq.s32.totalorder %s31, 2
      %p75 = por %p73, %p74
      %p76 = scmp.ne.s32.totalorder %s65, %s66
      %p77 = scmp.eq.s32.totalorder %s31, 0
      %p78 = por %p76, %p77
      %p79 = scmp.ne.s32.totalorder %s65, %s66
      %p80 = scmp.eq.s32.totalorder %s32, 2
      %p81 = por %p79, %p80
      %p83 = scmp.ne.s32.totalorder %s66, %s82
      %p84 = scmp.eq.s32.totalorder %s32, 0
      %p85 = por %p83, %p84
      %s87 = sadd.s32 %s86, 1
      %p90 = scmp.eq.s32.totalorder %s26, 2
      %p91 = scmp.ne.s32.totalorder %s86, %s88
      %p92 = scmp.eq.s32.totalorder %s26, 0
      %p93 = por %p91, %p92
      %p94 = scmp.ne.s32.totalorder %s86, %s88
      %p95 = scmp.eq.s32.totalorder %s31, 2
      %p96 = por %p94, %p95
      %p97 = scmp.ne.s32.totalorder %s88, %s89
      %p98 = scmp.eq.s32.totalorder %s31, 0
      %p99 = por %p97, %p98
      %p100 = scmp.ne.s32.totalorder %s88, %s89
      %p101 = scmp.eq.s32.totalorder %s32, 2
      %p102 = por %p100, %p101
      %p104 = scmp.ne.s32.totalorder %s89, %s103
      %p105 = scmp.eq.s32.totalorder %s32, 0
      %p106 = por %p104, %p105
      %s108 = sadd.s32 %s107, 1
      %p111 = scmp.eq.s32.totalorder %s26, 2
      %p112 = scmp.ne.s32.totalorder %s107, %s109
      %p113 = scmp.eq.s32.totalorder %s26, 0
      %p114 = por %p112, %p113
      %p115 = scmp.ne.s32.totalorder %s107, %s109
      %p116 = scmp.eq.s32.totalorder %s31, 2
      %p117 = por %p115, %p116
      %p118 = scmp.ne.s32.totalorder %s109, %s110
      %p119 = scmp.eq.s32.totalorder %s31, 0
      %p120 = por %p118, %p119
      %p121 = scmp.ne.s32.totalorder %s109, %s110
      %p122 = scmp.eq.s32.totalorder %s32, 2
      %p123 = por %p121, %p122
      %p125 = scmp.ne.s32.totalorder %s110, %s124
      %p126 = scmp.eq.s32.totalorder %s32, 0
      %p127 = por %p125, %p126
      %s129 = sadd.s32 %s128, 1
      %p132 = scmp.eq.s32.totalorder %s26, 2
      %p133 = scmp.ne.s32.totalorder %s128, %s130
      %p134 = scmp.eq.s32.totalorder %s26, 0
      %p135 = por %p133, %p134
      %p136 = scmp.ne.s32.totalorder %s128, %s130
      %p137 = scmp.eq.s32.totalorder %s31, 2
      %p138 = por %p136, %p137
      %p139 = scmp.ne.s32.totalorder %s130, %s131
      %p140 = scmp.eq.s32.totalorder %s31, 0
      %p141 = por %p139, %p140
      %p142 = scmp.ne.s32.totalorder %s130, %s131
      %p143 = scmp.eq.s32.totalorder %s32, 2
      %p144 = por %p142, %p143
      %p146 = scmp.ne.s32.totalorder %s131, %s145
      %p147 = scmp.eq.s32.totalorder %s32, 0
      %p148 = por %p146, %p147
      %s150 = sadd.s32 %s149, 1
      %p153 = scmp.eq.s32.totalorder %s26, 2
      %p154 = scmp.ne.s32.totalorder %s149, %s151
      %p155 = scmp.eq.s32.totalorder %s26, 0
      %p156 = por %p154, %p155
      %p157 = scmp.ne.s32.totalorder %s149, %s151
      %p158 = scmp.eq.s32.totalorder %s31, 2
      %p159 = por %p157, %p158
      %p160 = scmp.ne.s32.totalorder %s151, %s152
      %p161 = scmp.eq.s32.totalorder %s31, 0
      %p162 = por %p160, %p161
      %p163 = scmp.ne.s32.totalorder %s151, %s152
      %p164 = scmp.eq.s32.totalorder %s32, 2
      %p165 = por %p163, %p164
      %p167 = scmp.ne.s32.totalorder %s152, %s166
      %p168 = scmp.eq.s32.totalorder %s32, 0
      %p169 = por %p167, %p168
      %s171 = sadd.s32 %s170, 1
      %p174 = scmp.eq.s32.totalorder %s26, 2
      %p175 = scmp.ne.s32.totalorder %s170, %s172
      %p176 = scmp.eq.s32.totalorder %s26, 0
      %p177 = por %p175, %p176
      %p178 = scmp.ne.s32.totalorder %s170, %s172
      %p179 = scmp.eq.s32.totalorder %s31, 2
      %p180 = por %p178, %p179
      %p181 = scmp.ne.s32.totalorder %s172, %s173
      %p182 = scmp.eq.s32.totalorder %s31, 0
      %p183 = por %p181, %p182
      %p184 = scmp.ne.s32.totalorder %s172, %s173
      %p185 = scmp.eq.s32.totalorder %s32, 2
      %p186 = por %p184, %p185
      %p188 = scmp.ne.s32.totalorder %s173, %s187
      %p189 = scmp.eq.s32.totalorder %s32, 0
      %p190 = por %p188, %p189
      %s192 = sadd.s32 %s191, 1
      %p195 = scmp.eq.s32.totalorder %s26, 2
      %p196 = scmp.ne.s32.totalorder %s191, %s193
      %p197 = scmp.eq.s32.totalorder %s26, 0
      %p198 = por %p196, %p197
      %p199 = scmp.ne.s32.totalorder %s191, %s193
      %p200 = scmp.eq.s32.totalorder %s31, 2
      %p201 = por %p199, %p200
      %p202 = scmp.ne.s32.totalorder %s193, %s194
      %p203 = scmp.eq.s32.totalorder %s31, 0
      %p204 = por %p202, %p203
      %p205 = scmp.ne.s32.totalorder %s193, %s194
      %p206 = scmp.eq.s32.totalorder %s32, 2
      %p207 = por %p205, %p206
      %p209 = scmp.ne.s32.totalorder %s194, %s208
      %p210 = scmp.eq.s32.totalorder %s32, 0
      %p211 = por %p209, %p210
      %s212 = ssub.s32 %s26, %s33
      %p213 = scmp.eq.s32.totalorder %s212, 0
      %s215 = sadd.s32 %s214, 1
      %s216 = scalar_select %p213, %s214, %s215
      %p219 = pneg %p213
      %p220 = scmp.eq.s32.totalorder %s26, 2
      %p221 = por %p219, %p220
      %p222 = scmp.ne.s32.totalorder %s214, %s217
      %p223 = scmp.eq.s32.totalorder %s26, 0
      %p224 = por %p222, %p223
      %p225 = scmp.ne.s32.totalorder %s214, %s217
      %p226 = scmp.eq.s32.totalorder %s31, 2
      %p227 = por %p225, %p226
      %p228 = scmp.ne.s32.totalorder %s217, %s218
      %p229 = scmp.eq.s32.totalorder %s31, 0
      %p230 = por %p228, %p229
      %p231 = scmp.ne.s32.totalorder %s217, %s218
      %p232 = scmp.eq.s32.totalorder %s32, 2
      %p233 = por %p231, %p232
      %p235 = scmp.ne.s32.totalorder %s218, %s234
      %p236 = scmp.eq.s32.totalorder %s32, 0
      %p237 = por %p235, %p236
      %p238 = scmp.le.s32.totalorder 1, %s26
      %p239 = scmp.lt.s32.totalorder %s26, 4
      %p240 = pnand %p238, %p239
      %p241 = pneg %p240
      // Predicated region
      $region9: #{tpu_custom_call.1} parent=5 // pred_check
        _
      $region10: #{tpu_custom_call.1} parent=5 // pred_check_branch
        %243 = sbr.rel (%p240) target = $region12
      $region11: #{tpu_custom_call.1} parent=5 // pred_region
        %s244 = ssub.s32 %s26, 1
        // Predicated region
        $region13: #{tpu_custom_call.1} parent=11 // pred_check
          %p245 = pneg %p99
        $region14: #{tpu_custom_call.1} parent=11 // pred_check_branch
          %247 = sbr.rel (%p245) target = $region16
        $region15: #{tpu_custom_call.1} parent=11 // pred_region
          _
        $region16: #{tpu_custom_call.1} parent=11 // pred_fallthru
          _
        // Predicated region
        $region17: #{tpu_custom_call.1} parent=11 // pred_check
          %p248 = pneg %p120
        $region18: #{tpu_custom_call.1} parent=11 // pred_check_branch
          %250 = sbr.rel (%p248) target = $region20
        $region19: #{tpu_custom_call.1} parent=11 // pred_region
          %s252 = ssub.s32 512, 512
          %253 = vsyncadd [#allocation8], %s252
          %s254 = sshll.u32 [#allocation9], 4
          %s255 = int_to_ptr.vmem [resolvable:$true] %s254
          %260 = dma.hbm_to_vmem [thread:$0]  %s3, 512, %s255, [#allocation8], 128, 128, 8
        $region20: #{tpu_custom_call.1} parent=11 // pred_fallthru
          _
        // Predicated region
        $region21: #{tpu_custom_call.1} parent=11 // pred_check
          %p261 = pneg %p141
        $region22: #{tpu_custom_call.1} parent=11 // pred_check_branch
          %263 = sbr.rel (%p261) target = $region24
        $region23: #{tpu_custom_call.1} parent=11 // pred_region
          %s265 = ssub.s32 512, 512
          %266 = vsyncadd [#allocation11], %s265
          %s267 = sshll.u32 [#allocation10], 4
          %s268 = int_to_ptr.vmem [resolvable:$true] %s267
          %273 = dma.hbm_to_vmem [thread:$0]  %s4, 512, %s268, [#allocation11], 128, 128, 8
        $region24: #{tpu_custom_call.1} parent=11 // pred_fallthru
          _
        // Predicated region
        $region25: #{tpu_custom_call.1} parent=11 // pred_check
          %p274 = pneg %p162
        $region26: #{tpu_custom_call.1} parent=11 // pred_check_branch
          %276 = sbr.rel (%p274) target = $region28
        $region27: #{tpu_custom_call.1} parent=11 // pred_region
          _
        $region28: #{tpu_custom_call.1} parent=11 // pred_fallthru
          _
        // Predicated region
        $region29: #{tpu_custom_call.1} parent=11 // pred_check
          %p277 = pneg %p183
        $region30: #{tpu_custom_call.1} parent=11 // pred_check_branch
          %279 = sbr.rel (%p277) target = $region32
        $region31: #{tpu_custom_call.1} parent=11 // pred_region
          %s281 = ssub.s32 16, 16
          %282 = vsyncadd [#allocation6], %s281
          %s284 = sshll.u32 %s6, 4
          %s285 = int_to_ptr.vmem [resolvable:$true] %s284
          %287 = dma.vmem_to_smem %s285, 16, [#allocation12], [#allocation6]
        $region32: #{tpu_custom_call.1} parent=11 // pred_fallthru
          _
        // Predicated region
        $region33: #{tpu_custom_call.1} parent=11 // pred_check
          %p288 = pneg %p204
        $region34: #{tpu_custom_call.1} parent=11 // pred_check_branch
          %290 = sbr.rel (%p288) target = $region36
        $region35: #{tpu_custom_call.1} parent=11 // pred_region
          %s292 = ssub.s32 16, 16
          %293 = vsyncadd [#allocation14], %s292
          %s295 = sshll.u32 %s7, 4
          %s296 = int_to_ptr.vmem [resolvable:$true] %s295
          %298 = dma.vmem_to_smem %s296, 16, [#allocation13], [#allocation14]
        $region36: #{tpu_custom_call.1} parent=11 // pred_fallthru
          _
      $region12: #{tpu_custom_call.1} parent=5 // pred_fallthru
        _
      %p299 = scmp.lt.s32.totalorder %s26, 3
      // Predicated region
      $region37: #{tpu_custom_call.1} parent=5 // pred_check
        %p300 = pneg %p299
      $region38: #{tpu_custom_call.1} parent=5 // pred_check_branch
        %302 = sbr.rel (%p300) target = $region40
      $region39: #{tpu_custom_call.1} parent=5 // pred_region
        // Predicated region
        $region41: #{tpu_custom_call.1} parent=39 // pred_check
          %p303 = pneg %p46
        $region42: #{tpu_custom_call.1} parent=39 // pred_check_branch
          %305 = sbr.rel (%p303) target = $region44
        $region43: #{tpu_custom_call.1} parent=39 // pred_region
          %s306 = sand.u32 %s36, 1
          %s307 = scalar_lea.sflag [#allocation4], %s306
          %s308 = sand.u32 %s36, 1
          %s309 = smul.addr %s308, 64
          %s310 = scalar_lea.vmem [#allocation3], %s309
          %s311 = smul.u32 8, %s26
          %s313 = ssub.s32 1024, 1024
          %314 = vsyncadd %s307, %s313
          %s315 = smul.addr %s311, 128
          %s316 = scalar_lea.hbm %s0, %s315
          %s318 = sshll.u32 %s310, 4
          %s319 = int_to_ptr.vmem [resolvable:$true] %s318
          %321 = dma.hbm_to_vmem [thread:$0]  %s316, 1024, %s319, %s307
        $region44: #{tpu_custom_call.1} parent=39 // pred_fallthru
          _
        // Predicated region
        $region45: #{tpu_custom_call.1} parent=39 // pred_check
          %p322 = pneg %p72
        $region46: #{tpu_custom_call.1} parent=39 // pred_check_branch
          %324 = sbr.rel (%p322) target = $region48
        $region47: #{tpu_custom_call.1} parent=39 // pred_region
          %s325 = sand.u32 %s26, 1
          %s326 = scalar_lea.sflag [#allocation8], %s325
          %s327 = sand.u32 %s62, 1
          %s328 = smul.addr %s327, 8
          %s329 = scalar_lea.vmem [#allocation7], %s328
          %s331 = ssub.s32 128, 128
          %332 = vsyncadd %s326, %s331
          %s333 = smul.addr %s26, 128
          %s334 = scalar_lea.hbm %s1, %s333
          %s336 = sshll.u32 %s329, 4
          %s337 = int_to_ptr.vmem [resolvable:$true] %s336
          %339 = dma.hbm_to_vmem [thread:$0]  %s334, 128, %s337, %s326
        $region48: #{tpu_custom_call.1} parent=39 // pred_fallthru
          _
      $region40: #{tpu_custom_call.1} parent=5 // pred_fallthru
        _
      %p340 = scmp.le.s32.totalorder 1, %s26
      %p341 = scmp.lt.s32.totalorder %s26, 4
      %p342 = pnand %p340, %p341
      %p343 = pneg %p342
      // Predicated region
      $region49: #{tpu_custom_call.1} parent=5 // pred_check
        _
      $region50: #{tpu_custom_call.1} parent=5 // pred_check_branch
        %345 = sbr.rel (%p342) target = $region52
      $region51: #{tpu_custom_call.1} parent=5 // pred_region
        %s346 = ssub.s32 %s26, 1
        %s347 = sand.u32 %s39, 1
        %s348 = scalar_lea.sflag [#allocation4], %s347
        %s349 = sand.u32 %s39, 1
        %s350 = smul.addr %s349, 64
        %s351 = scalar_lea.vmem [#allocation3], %s350
        // Predicated region
        $region53: #{tpu_custom_call.1} parent=51 // pred_check
          %p352 = pneg %p52
        $region54: #{tpu_custom_call.1} parent=51 // pred_check_branch
          %354 = sbr.rel (%p352) target = $region56
        $region55: #{tpu_custom_call.1} parent=51 // pred_region
          %355 = dma.done %s348, 1024
        $region56: #{tpu_custom_call.1} parent=51 // pred_fallthru
          _
        %s356 = sand.u32 %s31, 1
        %s357 = scalar_lea.sflag [#allocation8], %s356
        %s358 = sand.u32 %s65, 1
        %s359 = smul.addr %s358, 8
        %s360 = scalar_lea.vmem [#allocation7], %s359
        // Predicated region
        $region57: #{tpu_custom_call.1} parent=51 // pred_check
          %p361 = pneg %p78
        $region58: #{tpu_custom_call.1} parent=51 // pred_check_branch
          %363 = sbr.rel (%p361) target = $region60
        $region59: #{tpu_custom_call.1} parent=51 // pred_region
          %364 = dma.done %s357, 128
        $region60: #{tpu_custom_call.1} parent=51 // pred_fallthru
          _
        // Predicated region
        $region61: #{tpu_custom_call.1} parent=51 // pred_check
          %p365 = pneg %p120
        $region62: #{tpu_custom_call.1} parent=51 // pred_check_branch
          %367 = sbr.rel (%p365) target = $region64
        $region63: #{tpu_custom_call.1} parent=51 // pred_region
          %368 = dma.done [#allocation8], 512
        $region64: #{tpu_custom_call.1} parent=51 // pred_fallthru
          _
        // Predicated region
        $region65: #{tpu_custom_call.1} parent=51 // pred_check
          %p369 = pneg %p141
        $region66: #{tpu_custom_call.1} parent=51 // pred_check_branch
          %371 = sbr.rel (%p369) target = $region68
        $region67: #{tpu_custom_call.1} parent=51 // pred_region
          %372 = dma.done [#allocation11], 512
        $region68: #{tpu_custom_call.1} parent=51 // pred_fallthru
          _
        // Predicated region
        $region69: #{tpu_custom_call.1} parent=51 // pred_check
          %p373 = pneg %p183
        $region70: #{tpu_custom_call.1} parent=51 // pred_check_branch
          %375 = sbr.rel (%p373) target = $region72
        $region71: #{tpu_custom_call.1} parent=51 // pred_region
          %376 = dma.done [#allocation6], 16
        $region72: #{tpu_custom_call.1} parent=51 // pred_fallthru
          _
        // Predicated region
        $region73: #{tpu_custom_call.1} parent=51 // pred_check
          %p377 = pneg %p204
        $region74: #{tpu_custom_call.1} parent=51 // pred_check_branch
          %379 = sbr.rel (%p377) target = $region76
        $region75: #{tpu_custom_call.1} parent=51 // pred_region
          %380 = dma.done [#allocation14], 16
        $region76: #{tpu_custom_call.1} parent=51 // pred_fallthru
          _
        %381 = sfence
        %s382 = sand.u32 %s39, 1
        %s383 = scalar_lea.sflag [#allocation4], %s382
        %s384 = sand.u32 %s39, 1
        %s385 = smul.addr %s384, 64
        %s386 = scalar_lea.vmem [#allocation3], %s385
        %p387 = pneg %p52
        %p388 = pneg %p49
        %s389 = sand.u32 %s31, 1
        %s390 = scalar_lea.sflag [#allocation8], %s389
        %s391 = sand.u32 %s65, 1
        %s392 = smul.addr %s391, 8
        %s393 = scalar_lea.vmem [#allocation7], %s392
        %p394 = pneg %p78
        %p395 = pneg %p75
        %p396 = pneg %p99
        %p397 = pneg %p96
        %p398 = pneg %p120
        %p399 = pneg %p117
        %p400 = pneg %p141
        %p401 = pneg %p138
        %p402 = pneg %p162
        %p403 = pneg %p159
        %p404 = pneg %p183
        %p405 = pneg %p180
        %p406 = pneg %p204
        %p407 = pneg %p201
        %p408 = pneg %p230
        %p409 = pneg %p227
        %s410 = sand.u32 %s217, 1
        %s411 = scalar_lea.sflag [#allocation5], %s410
        %s412 = sand.u32 %s217, 1
        %s413 = smul.addr %s412, 8
        %s414 = scalar_lea.vmem [#allocation15], %s413
        %s415 = smul.u32 8, %s31
        %v416 = vld [vmem:[%s351] sm:$0xff]
        %v417 = vld [vmem:[%s351 + $0x8] sm:$0xff]
        %v418 = vld [vmem:[%s351 + $0x10] sm:$0xff]
        %v419 = vld [vmem:[%s351 + $0x18] sm:$0xff]
        %v420 = vld [vmem:[%s351 + $0x20] sm:$0xff]
        %v421 = vld [vmem:[%s351 + $0x28] sm:$0xff]
        %v422 = vld [vmem:[%s351 + $0x30] sm:$0xff]
        %v423 = vld [vmem:[%s351 + $0x38] sm:$0xff]
        %v424 = vmul.f32 %v416, %v416
        %v425 = vmul.f32 %v417, %v417
        %v426 = vmul.f32 %v418, %v418
        %v427 = vmul.f32 %v419, %v419
        %v428 = vmul.f32 %v420, %v420
        %v429 = vmul.f32 %v421, %v421
        %v430 = vmul.f32 %v422, %v422
        %v431 = vmul.f32 %v423, %v423
        %432 = vst [vmem:[#allocation2] sm:$0xff] %v416
        %433 = vst [vmem:[#allocation2 + $0x8] sm:$0xff] %v417
        %434 = vst [vmem:[#allocation2 + $0x10] sm:$0xff] %v418
        %435 = vst [vmem:[#allocation2 + $0x18] sm:$0xff] %v419
        %436 = vst [vmem:[#allocation2 + $0x20] sm:$0xff] %v420
        %437 = vst [vmem:[#allocation2 + $0x28] sm:$0xff] %v421
        %438 = vst [vmem:[#allocation2 + $0x30] sm:$0xff] %v422
        %439 = vst [vmem:[#allocation2 + $0x38] sm:$0xff] %v423
        %440 = vst [vmem:[#allocation2 + $0x40] sm:$0xff] %v424
        %441 = vst [vmem:[#allocation2 + $0x48] sm:$0xff] %v425
        %442 = vst [vmem:[#allocation2 + $0x50] sm:$0xff] %v426
        %443 = vst [vmem:[#allocation2 + $0x58] sm:$0xff] %v427
        %444 = vst [vmem:[#allocation2 + $0x60] sm:$0xff] %v428
        %445 = vst [vmem:[#allocation2 + $0x68] sm:$0xff] %v429
        %446 = vst [vmem:[#allocation2 + $0x70] sm:$0xff] %v430
        %447 = vst [vmem:[#allocation2 + $0x78] sm:$0xff] %v431
        %v448 = vmul.f32 %v424, %v416
        %v449 = vmul.f32 %v425, %v417
        %v450 = vmul.f32 %v426, %v418
        %v451 = vmul.f32 %v427, %v419
        %v452 = vmul.f32 %v428, %v420
        %v453 = vmul.f32 %v429, %v421
        %v454 = vmul.f32 %v430, %v422
        %v455 = vmul.f32 %v431, %v423
        %456 = vst [vmem:[#allocation2 + $0x80] sm:$0xff] %v448
        %457 = vst [vmem:[#allocation2 + $0x88] sm:$0xff] %v449
        %458 = vst [vmem:[#allocation2 + $0x90] sm:$0xff] %v450
        %459 = vst [vmem:[#allocation2 + $0x98] sm:$0xff] %v451
        %460 = vst [vmem:[#allocation2 + $0xa0] sm:$0xff] %v452
        %461 = vst [vmem:[#allocation2 + $0xa8] sm:$0xff] %v453
        %462 = vst [vmem:[#allocation2 + $0xb0] sm:$0xff] %v454
        %463 = vst [vmem:[#allocation2 + $0xb8] sm:$0xff] %v455
        %v464 = vld [vmem:[%s2] sm:$0xff]
        %v465 = vld [vmem:[%s2 + $0x8] sm:$0xff]
        %v466 = vld [vmem:[%s2 + $0x10] sm:$0xff]
        %v467 = vld [vmem:[%s2 + $0x18] sm:$0xff]
        %v468 = vld [vmem:[#allocation2] sm:$0xff]
        %v469 = vld [vmem:[#allocation2 + $0x8] sm:$0xff]
        %v470 = vld [vmem:[#allocation2 + $0x10] sm:$0xff]
        %v471 = vld [vmem:[#allocation2 + $0x18] sm:$0xff]
        %v472 = vld [vmem:[#allocation2 + $0x20] sm:$0xff]
        %v473 = vld [vmem:[#allocation2 + $0x28] sm:$0xff]
        %v474 = vld [vmem:[#allocation2 + $0x30] sm:$0xff]
        %v475 = vld [vmem:[#allocation2 + $0x38] sm:$0xff]
        %v476 = vld [vmem:[#allocation2 + $0x40] sm:$0xff]
        %v477 = vld [vmem:[#allocation2 + $0x48] sm:$0xff]
        %v478 = vld [vmem:[#allocation2 + $0x50] sm:$0xff]
        %v479 = vld [vmem:[#allocation2 + $0x58] sm:$0xff]
        %v480 = vld [vmem:[#allocation2 + $0x60] sm:$0xff]
        %v481 = vld [vmem:[#allocation2 + $0x68] sm:$0xff]
        %v482 = vld [vmem:[#allocation2 + $0x70] sm:$0xff]
        %v483 = vld [vmem:[#allocation2 + $0x78] sm:$0xff]
        %v484 = vld [vmem:[#allocation2 + $0x80] sm:$0xff]
        %v485 = vld [vmem:[#allocation2 + $0x88] sm:$0xff]
        %v486 = vld [vmem:[#allocation2 + $0x90] sm:$0xff]
        %v487 = vld [vmem:[#allocation2 + $0x98] sm:$0xff]
        %v488 = vld [vmem:[#allocation2 + $0xa0] sm:$0xff]
        %v489 = vld [vmem:[#allocation2 + $0xa8] sm:$0xff]
        %v490 = vld [vmem:[#allocation2 + $0xb0] sm:$0xff]
        %v491 = vld [vmem:[#allocation2 + $0xb8] sm:$0xff]
        %vm492 = vcmask 195584
        %v494 = vsel %vm492, %v464, 0
        %v497 = vsel %vm492, %v465, 0
        %v500 = vsel %vm492, %v466, 0
        %v503 = vsel %vm492, %v467, 0
        %505 = vmatprep.subr.mxu0 %v469
        %506 = vmatpush1.msra.mxu0 %v468
        %507 = vmatprep.subr.mxu0 %v477
        %508 = vmatpush1.msra.mxu0 %v476
        %509 = vmatprep.subr.mxu0 %v485
        %510 = vmatpush1.msra.mxu0 %v484
        %511 = vmatprep.subr.mxu0 0.0
        %512 = vmatpush1.msra.mxu0 0.0
        %513 = vmatprep.subr.mxu0 0.0
        %514 = vmatpush1.msra.mxu0 0.0
        %515 = vmatprep.subr.mxu0 0.0
        %516 = vmatpush1.msra.mxu0 0.0
        %517 = vmatprep.subr.mxu0 0.0
        %518 = vmatpush1.msra.mxu0 0.0
        %519 = vmatprep.subr.mxu0 0.0
        %520 = vmatpush1.msra.mxu0 0.0
        %521 = vmatprep.subr.mxu0 0.0
        %522 = vmatpush1.msra.mxu0 0.0
        %523 = vmatprep.subr.mxu0 0.0
        %524 = vmatpush1.msra.mxu0 0.0
        %525 = vmatprep.subr.mxu0 0.0
        %526 = vmatpush1.msra.mxu0 0.0
        %527 = vmatprep.subr.mxu0 0.0
        %528 = vmatpush1.msra.mxu0 0.0
        %529 = vmatprep.subr.mxu0 0.0
        %530 = vmatpush1.msra.mxu0 0.0
        %531 = vmatprep.subr.mxu0 0.0
        %532 = vmatpush1.msra.mxu0 0.0
        %533 = vmatprep.subr.mxu0 0.0
        %534 = vmatpush1.msra.mxu0 0.0
        %535 = vmatprep.subr.mxu0 0.0
        %536 = vmatpush1.msra.mxu0 0.0
        %537 = vmatprep.subr.mxu0 0.0
        %538 = vmatpush1.msra.mxu0 0.0
        %539 = vmatprep.subr.mxu0 0.0
        %540 = vmatpush1.msra.mxu0 0.0
        %541 = vmatprep.subr.mxu0 0.0
        %542 = vmatpush1.msra.mxu0 0.0
        %543 = vmatprep.subr.mxu0 0.0
        %544 = vmatpush1.msra.mxu0 0.0
        %545 = vmatprep.subr.mxu0 0.0
        %546 = vmatpush1.msra.mxu0 0.0
        %547 = vmatprep.subr.mxu0 0.0
        %548 = vmatpush1.msra.mxu0 0.0
        %549 = vmatprep.subr.mxu0 0.0
        %550 = vmatpush1.msra.mxu0 0.0
        %551 = vmatprep.subr.mxu0 0.0
        %552 = vmatpush1.msra.mxu0 0.0
        %553 = vmatprep.subr.mxu0 0.0
        %554 = vmatpush1.msra.mxu0 0.0
        %555 = vmatprep.subr.mxu0 0.0
        %556 = vmatpush1.msra.mxu0 0.0
        %557 = vmatprep.subr.mxu0 0.0
        %558 = vmatpush1.msra.mxu0 0.0
        %559 = vmatprep.subr.mxu0 0.0
        %560 = vmatpush1.msra.mxu0 0.0
        %561 = vmatprep.subr.mxu0 0.0
        %562 = vmatpush1.msra.mxu0 0.0
        %563 = vmatprep.subr.mxu0 0.0
        %564 = vmatpush1.msra.mxu0 0.0
        %565 = vmatprep.subr.mxu0 0.0
        %566 = vmatpush1.msra.mxu0 0.0
        %567 = vmatprep.subr.mxu0 0.0
        %568 = vmatpush1.msra.mxu0 0.0
        %569 = vmatprep.mubr.f32.mxu0 0.0
        %570 = vmatmul.mubr.f32.gmra.mrb[0].mxu0 %v494
        %v571 = vpop.f32.mrb[0].mxu0
        %v572 = vadd.f32 0.0, %v571
        %v573 = vpop.f32.mrb[0].mxu0
        %v574 = vadd.f32 0.0, %v573
        %575 = vmatprep.mubr.f32.mxu0 0.0
        %576 = vmatmul.mubr.f32.gmra.mrb[0].mxu0 %v497
        %v577 = vpop.f32.mrb[0].mxu0
        %v578 = vadd.f32 0.0, %v577
        %v579 = vpop.f32.mrb[0].mxu0
        %v580 = vadd.f32 0.0, %v579
        %581 = vmatprep.mubr.f32.mxu0 0.0
        %582 = vmatmul.mubr.f32.gmra.mrb[0].mxu0 %v500
        %v583 = vpop.f32.mrb[0].mxu0
        %v584 = vadd.f32 0.0, %v583
        %v585 = vpop.f32.mrb[0].mxu0
        %v586 = vadd.f32 0.0, %v585
        %587 = vmatprep.mubr.f32.mxu0 0.0
        %588 = vmatmul.mubr.f32.gmra.mrb[0].mxu0 %v503
        %v589 = vpop.f32.mrb[0].mxu0
        %v590 = vadd.f32 0.0, %v589
        %v591 = vpop.f32.mrb[0].mxu0
        %v592 = vadd.f32 0.0, %v591
        %593 = vdwg.mxu0
        %594 = vmatprep.subr.mxu0 %v471
        %595 = vmatpush1.msra.mxu0 %v470
        %596 = vmatprep.subr.mxu0 %v479
        %597 = vmatpush1.msra.mxu0 %v478
        %598 = vmatprep.subr.mxu0 %v487
        %599 = vmatpush1.msra.mxu0 %v486
        %600 = vmatprep.subr.mxu0 0.0
        %601 = vmatpush1.msra.mxu0 0.0
        %602 = vmatprep.subr.mxu0 0.0
        %603 = vmatpush1.msra.mxu0 0.0
        %604 = vmatprep.subr.mxu0 0.0
        %605 = vmatpush1.msra.mxu0 0.0
        %606 = vmatprep.subr.mxu0 0.0
        %607 = vmatpush1.msra.mxu0 0.0
        %608 = vmatprep.subr.mxu0 0.0
        %609 = vmatpush1.msra.mxu0 0.0
        %610 = vmatprep.subr.mxu0 0.0
        %611 = vmatpush1.msra.mxu0 0.0
        %612 = vmatprep.subr.mxu0 0.0
        %613 = vmatpush1.msra.mxu0 0.0
        %614 = vmatprep.subr.mxu0 0.0
        %615 = vmatpush1.msra.mxu0 0.0
        %616 = vmatprep.subr.mxu0 0.0
        %617 = vmatpush1.msra.mxu0 0.0
        %618 = vmatprep.subr.mxu0 0.0
        %619 = vmatpush1.msra.mxu0 0.0
        %620 = vmatprep.subr.mxu0 0.0
        %621 = vmatpush1.msra.mxu0 0.0
        %622 = vmatprep.subr.mxu0 0.0
        %623 = vmatpush1.msra.mxu0 0.0
        %624 = vmatprep.subr.mxu0 0.0
        %625 = vmatpush1.msra.mxu0 0.0
        %626 = vmatprep.subr.mxu0 0.0
        %627 = vmatpush1.msra.mxu0 0.0
        %628 = vmatprep.subr.mxu0 0.0
        %629 = vmatpush1.msra.mxu0 0.0
        %630 = vmatprep.subr.mxu0 0.0
        %631 = vmatpush1.msra.mxu0 0.0
        %632 = vmatprep.subr.mxu0 0.0
        %633 = vmatpush1.msra.mxu0 0.0
        %634 = vmatprep.subr.mxu0 0.0
        %635 = vmatpush1.msra.mxu0 0.0
        %636 = vmatprep.subr.mxu0 0.0
        %637 = vmatpush1.msra.mxu0 0.0
        %638 = vmatprep.subr.mxu0 0.0
        %639 = vmatpush1.msra.mxu0 0.0
        %640 = vmatprep.subr.mxu0 0.0
        %641 = vmatpush1.msra.mxu0 0.0
        %642 = vmatprep.subr.mxu0 0.0
        %643 = vmatpush1.msra.mxu0 0.0
        %644 = vmatprep.subr.mxu0 0.0
        %645 = vmatpush1.msra.mxu0 0.0
        %646 = vmatprep.subr.mxu0 0.0
        %647 = vmatpush1.msra.mxu0 0.0
        %648 = vmatprep.subr.mxu0 0.0
        %649 = vmatpush1.msra.mxu0 0.0
        %650 = vmatprep.subr.mxu0 0.0
        %651 = vmatpush1.msra.mxu0 0.0
        %652 = vmatprep.subr.mxu0 0.0
        %653 = vmatpush1.msra.mxu0 0.0
        %654 = vmatprep.subr.mxu0 0.0
        %655 = vmatpush1.msra.mxu0 0.0
        %656 = vmatprep.subr.mxu0 0.0
        %657 = vmatpush1.msra.mxu0 0.0
        %658 = vmatprep.mubr.f32.mxu0 0.0
        %659 = vmatmul.mubr.f32.gmra.mrb[0].mxu0 %v494
        %v660 = vpop.f32.mrb[0].mxu0
        %v661 = vadd.f32 0.0, %v660
        %v662 = vpop.f32.mrb[0].mxu0
        %v663 = vadd.f32 0.0, %v662
        %664 = vmatprep.mubr.f32.mxu0 0.0
        %665 = vmatmul.mubr.f32.gmra.mrb[0].mxu0 %v497
        %v666 = vpop.f32.mrb[0].mxu0
        %v667 = vadd.f32 0.0, %v666
        %v668 = vpop.f32.mrb[0].mxu0
        %v669 = vadd.f32 0.0, %v668
        %670 = vmatprep.mubr.f32.mxu0 0.0
        %671 = vmatmul.mubr.f32.gmra.mrb[0].mxu0 %v500
        %v672 = vpop.f32.mrb[0].mxu0
        %v673 = vadd.f32 0.0, %v672
        %v674 = vpop.f32.mrb[0].mxu0
        %v675 = vadd.f32 0.0, %v674
        %676 = vmatprep.mubr.f32.mxu0 0.0
        %677 = vmatmul.mubr.f32.gmra.mrb[0].mxu0 %v503
        %v678 = vpop.f32.mrb[0].mxu0
        %v679 = vadd.f32 0.0, %v678
        %v680 = vpop.f32.mrb[0].mxu0
        %v681 = vadd.f32 0.0, %v680
        %682 = vdwg.mxu0
        %683 = vmatprep.subr.mxu0 %v473
        %684 = vmatpush1.msra.mxu0 %v472
        %685 = vmatprep.subr.mxu0 %v481
        %686 = vmatpush1.msra.mxu0 %v480
        %687 = vmatprep.subr.mxu0 %v489
        %688 = vmatpush1.msra.mxu0 %v488
        %689 = vmatprep.subr.mxu0 0.0
        %690 = vmatpush1.msra.mxu0 0.0
        %691 = vmatprep.subr.mxu0 0.0
        %692 = vmatpush1.msra.mxu0 0.0
        %693 = vmatprep.subr.mxu0 0.0
        %694 = vmatpush1.msra.mxu0 0.0
        %695 = vmatprep.subr.mxu0 0.0
        %696 = vmatpush1.msra.mxu0 0.0
        %697 = vmatprep.subr.mxu0 0.0
        %698 = vmatpush1.msra.mxu0 0.0
        %699 = vmatprep.subr.mxu0 0.0
        %700 = vmatpush1.msra.mxu0 0.0
        %701 = vmatprep.subr.mxu0 0.0
        %702 = vmatpush1.msra.mxu0 0.0
        %703 = vmatprep.subr.mxu0 0.0
        %704 = vmatpush1.msra.mxu0 0.0
        %705 = vmatprep.subr.mxu0 0.0
        %706 = vmatpush1.msra.mxu0 0.0
        %707 = vmatprep.subr.mxu0 0.0
        %708 = vmatpush1.msra.mxu0 0.0
        %709 = vmatprep.subr.mxu0 0.0
        %710 = vmatpush1.msra.mxu0 0.0
        %711 = vmatprep.subr.mxu0 0.0
        %712 = vmatpush1.msra.mxu0 0.0
        %713 = vmatprep.subr.mxu0 0.0
        %714 = vmatpush1.msra.mxu0 0.0
        %715 = vmatprep.subr.mxu0 0.0
        %716 = vmatpush1.msra.mxu0 0.0
        %717 = vmatprep.subr.mxu0 0.0
        %718 = vmatpush1.msra.mxu0 0.0
        %719 = vmatprep.subr.mxu0 0.0
        %720 = vmatpush1.msra.mxu0 0.0
        %721 = vmatprep.subr.mxu0 0.0
        %722 = vmatpush1.msra.mxu0 0.0
        %723 = vmatprep.subr.mxu0 0.0
        %724 = vmatpush1.msra.mxu0 0.0
        %725 = vmatprep.subr.mxu0 0.0
        %726 = vmatpush1.msra.mxu0 0.0
        %727 = vmatprep.subr.mxu0 0.0
        %728 = vmatpush1.msra.mxu0 0.0
        %729 = vmatprep.subr.mxu0 0.0
        %730 = vmatpush1.msra.mxu0 0.0
        %731 = vmatprep.subr.mxu0 0.0
        %732 = vmatpush1.msra.mxu0 0.0
        %733 = vmatprep.subr.mxu0 0.0
        %734 = vmatpush1.msra.mxu0 0.0
        %735 = vmatprep.subr.mxu0 0.0
        %736 = vmatpush1.msra.mxu0 0.0
        %737 = vmatprep.subr.mxu0 0.0
        %738 = vmatpush1.msra.mxu0 0.0
        %739 = vmatprep.subr.mxu0 0.0
        %740 = vmatpush1.msra.mxu0 0.0
        %741 = vmatprep.subr.mxu0 0.0
        %742 = vmatpush1.msra.mxu0 0.0
        %743 = vmatprep.subr.mxu0 0.0
        %744 = vmatpush1.msra.mxu0 0.0
        %745 = vmatprep.subr.mxu0 0.0
        %746 = vmatpush1.msra.mxu0 0.0
        %747 = vmatprep.mubr.f32.mxu0 0.0
        %748 = vmatmul.mubr.f32.gmra.mrb[0].mxu0 %v494
        %v749 = vpop.f32.mrb[0].mxu0
        %v750 = vadd.f32 0.0, %v749
        %v751 = vpop.f32.mrb[0].mxu0
        %v752 = vadd.f32 0.0, %v751
        %753 = vmatprep.mubr.f32.mxu0 0.0
        %754 = vmatmul.mubr.f32.gmra.mrb[0].mxu0 %v497
        %v755 = vpop.f32.mrb[0].mxu0
        %v756 = vadd.f32 0.0, %v755
        %v757 = vpop.f32.mrb[0].mxu0
        %v758 = vadd.f32 0.0, %v757
        %759 = vmatprep.mubr.f32.mxu0 0.0
        %760 = vmatmul.mubr.f32.gmra.mrb[0].mxu0 %v500
        %v761 = vpop.f32.mrb[0].mxu0
        %v762 = vadd.f32 0.0, %v761
        %v763 = vpop.f32.mrb[0].mxu0
        %v764 = vadd.f32 0.0, %v763
        %765 = vmatprep.mubr.f32.mxu0 0.0
        %766 = vmatmul.mubr.f32.gmra.mrb[0].mxu0 %v503
        %v767 = vpop.f32.mrb[0].mxu0
        %v768 = vadd.f32 0.0, %v767
        %v769 = vpop.f32.mrb[0].mxu0
        %v770 = vadd.f32 0.0, %v769
        %771 = vdwg.mxu0
        %772 = vmatprep.subr.mxu0 %v475
        %773 = vmatpush1.msra.mxu0 %v474
        %774 = vmatprep.subr.mxu0 %v483
        %775 = vmatpush1.msra.mxu0 %v482
        %776 = vmatprep.subr.mxu0 %v491
        %777 = vmatpush1.msra.mxu0 %v490
        %778 = vmatprep.subr.mxu0 0.0
        %779 = vmatpush1.msra.mxu0 0.0
        %780 = vmatprep.subr.mxu0 0.0
        %781 = vmatpush1.msra.mxu0 0.0
        %782 = vmatprep.subr.mxu0 0.0
        %783 = vmatpush1.msra.mxu0 0.0
        %784 = vmatprep.subr.mxu0 0.0
        %785 = vmatpush1.msra.mxu0 0.0
        %786 = vmatprep.subr.mxu0 0.0
        %787 = vmatpush1.msra.mxu0 0.0
        %788 = vmatprep.subr.mxu0 0.0
        %789 = vmatpush1.msra.mxu0 0.0
        %790 = vmatprep.subr.mxu0 0.0
        %791 = vmatpush1.msra.mxu0 0.0
        %792 = vmatprep.subr.mxu0 0.0
        %793 = vmatpush1.msra.mxu0 0.0
        %794 = vmatprep.subr.mxu0 0.0
        %795 = vmatpush1.msra.mxu0 0.0
        %796 = vmatprep.subr.mxu0 0.0
        %797 = vmatpush1.msra.mxu0 0.0
        %798 = vmatprep.subr.mxu0 0.0
        %799 = vmatpush1.msra.mxu0 0.0
        %800 = vmatprep.subr.mxu0 0.0
        %801 = vmatpush1.msra.mxu0 0.0
        %802 = vmatprep.subr.mxu0 0.0
        %803 = vmatpush1.msra.mxu0 0.0
        %804 = vmatprep.subr.mxu0 0.0
        %805 = vmatpush1.msra.mxu0 0.0
        %806 = vmatprep.subr.mxu0 0.0
        %807 = vmatpush1.msra.mxu0 0.0
        %808 = vmatprep.subr.mxu0 0.0
        %809 = vmatpush1.msra.mxu0 0.0
        %810 = vmatprep.subr.mxu0 0.0
        %811 = vmatpush1.msra.mxu0 0.0
        %812 = vmatprep.subr.mxu0 0.0
        %813 = vmatpush1.msra.mxu0 0.0
        %814 = vmatprep.subr.mxu0 0.0
        %815 = vmatpush1.msra.mxu0 0.0
        %816 = vmatprep.subr.mxu0 0.0
        %817 = vmatpush1.msra.mxu0 0.0
        %818 = vmatprep.subr.mxu0 0.0
        %819 = vmatpush1.msra.mxu0 0.0
        %820 = vmatprep.subr.mxu0 0.0
        %821 = vmatpush1.msra.mxu0 0.0
        %822 = vmatprep.subr.mxu0 0.0
        %823 = vmatpush1.msra.mxu0 0.0
        %824 = vmatprep.subr.mxu0 0.0
        %825 = vmatpush1.msra.mxu0 0.0
        %826 = vmatprep.subr.mxu0 0.0
        %827 = vmatpush1.msra.mxu0 0.0
        %828 = vmatprep.subr.mxu0 0.0
        %829 = vmatpush1.msra.mxu0 0.0
        %830 = vmatprep.subr.mxu0 0.0
        %831 = vmatpush1.msra.mxu0 0.0
        %832 = vmatprep.subr.mxu0 0.0
        %833 = vmatpush1.msra.mxu0 0.0
        %834 = vmatprep.subr.mxu0 0.0
        %835 = vmatpush1.msra.mxu0 0.0
        %836 = vmatprep.mubr.f32.mxu0 0.0
        %837 = vmatmul.mubr.f32.gmra.mrb[0].mxu0 %v494
        %v838 = vpop.f32.mrb[0].mxu0
        %v839 = vadd.f32 0.0, %v838
        %v840 = vpop.f32.mrb[0].mxu0
        %v841 = vadd.f32 0.0, %v840
        %842 = vmatprep.mubr.f32.mxu0 0.0
        %843 = vmatmul.mubr.f32.gmra.mrb[0].mxu0 %v497
        %v844 = vpop.f32.mrb[0].mxu0
        %v845 = vadd.f32 0.0, %v844
        %v846 = vpop.f32.mrb[0].mxu0
        %v847 = vadd.f32 0.0, %v846
        %848 = vmatprep.mubr.f32.mxu0 0.0
        %849 = vmatmul.mubr.f32.gmra.mrb[0].mxu0 %v500
        %v850 = vpop.f32.mrb[0].mxu0
        %v851 = vadd.f32 0.0, %v850
        %v852 = vpop.f32.mrb[0].mxu0
        %v853 = vadd.f32 0.0, %v852
        %854 = vmatprep.mubr.f32.mxu0 0.0
        %855 = vmatmul.mubr.f32.gmra.mrb[0].mxu0 %v503
        %v856 = vpop.f32.mrb[0].mxu0
        %v857 = vadd.f32 0.0, %v856
        %v858 = vpop.f32.mrb[0].mxu0
        %v859 = vadd.f32 0.0, %v858
        %860 = vdwg.mxu0
        %v861 = vmax.f32 %v572, 0.0
        %v862 = vmax.f32 %v574, 0.0
        %v863 = vmax.f32 %v661, 0.0
        %v864 = vmax.f32 %v663, 0.0
        %v865 = vmax.f32 %v750, 0.0
        %v866 = vmax.f32 %v752, 0.0
        %v867 = vmax.f32 %v839, 0.0
        %v868 = vmax.f32 %v841, 0.0
        %v869 = vmax.f32 %v578, 0.0
        %v870 = vmax.f32 %v580, 0.0
        %v871 = vmax.f32 %v667, 0.0
        %v872 = vmax.f32 %v669, 0.0
        %v873 = vmax.f32 %v756, 0.0
        %v874 = vmax.f32 %v758, 0.0
        %v875 = vmax.f32 %v845, 0.0
        %v876 = vmax.f32 %v847, 0.0
        %v877 = vmax.f32 %v584, 0.0
        %v878 = vmax.f32 %v586, 0.0
        %v879 = vmax.f32 %v673, 0.0
        %v880 = vmax.f32 %v675, 0.0
        %v881 = vmax.f32 %v762, 0.0
        %v882 = vmax.f32 %v764, 0.0
        %v883 = vmax.f32 %v851, 0.0
        %v884 = vmax.f32 %v853, 0.0
        %v885 = vmax.f32 %v590, 0.0
        %v886 = vmax.f32 %v592, 0.0
        %v887 = vmax.f32 %v679, 0.0
        %v888 = vmax.f32 %v681, 0.0
        %v889 = vmax.f32 %v768, 0.0
        %v890 = vmax.f32 %v770, 0.0
        %v891 = vmax.f32 %v857, 0.0
        %v892 = vmax.f32 %v859, 0.0
        %v893 = vld [vmem:[#allocation9] sm:$0xff]
        %v894 = vld [vmem:[#allocation9 + $0x8] sm:$0xff]
        %v895 = vld [vmem:[#allocation9 + $0x10] sm:$0xff]
        %v896 = vld [vmem:[#allocation9 + $0x18] sm:$0xff]
        %vm897 = vcmask 261120
        %v899 = vsel %vm897, %v893, 0
        %v902 = vsel %vm897, %v894, 0
        %v905 = vsel %vm897, %v895, 0
        %v908 = vsel %vm897, %v896, 0
        %910 = vmatprep.subr.mxu0 %v862
        %911 = vmatpush1.msra.mxu0 %v861
        %912 = vmatprep.subr.mxu0 %v870
        %913 = vmatpush1.msra.mxu0 %v869
        %914 = vmatprep.subr.mxu0 %v878
        %915 = vmatpush1.msra.mxu0 %v877
        %916 = vmatprep.subr.mxu0 %v886
        %917 = vmatpush1.msra.mxu0 %v885
        %918 = vmatprep.subr.mxu0 0.0
        %919 = vmatpush1.msra.mxu0 0.0
        %920 = vmatprep.subr.mxu0 0.0
        %921 = vmatpush1.msra.mxu0 0.0
        %922 = vmatprep.subr.mxu0 0.0
        %923 = vmatpush1.msra.mxu0 0.0
        %924 = vmatprep.subr.mxu0 0.0
        %925 = vmatpush1.msra.mxu0 0.0
        %926 = vmatprep.subr.mxu0 0.0
        %927 = vmatpush1.msra.mxu0 0.0
        %928 = vmatprep.subr.mxu0 0.0
        %929 = vmatpush1.msra.mxu0 0.0
        %930 = vmatprep.subr.mxu0 0.0
        %931 = vmatpush1.msra.mxu0 0.0
        %932 = vmatprep.subr.mxu0 0.0
        %933 = vmatpush1.msra.mxu0 0.0
        %934 = vmatprep.subr.mxu0 0.0
        %935 = vmatpush1.msra.mxu0 0.0
        %936 = vmatprep.subr.mxu0 0.0
        %937 = vmatpush1.msra.mxu0 0.0
        %938 = vmatprep.subr.mxu0 0.0
        %939 = vmatpush1.msra.mxu0 0.0
        %940 = vmatprep.subr.mxu0 0.0
        %941 = vmatpush1.msra.mxu0 0.0
        %942 = vmatprep.subr.mxu0 0.0
        %943 = vmatpush1.msra.mxu0 0.0
        %944 = vmatprep.subr.mxu0 0.0
        %945 = vmatpush1.msra.mxu0 0.0
        %946 = vmatprep.subr.mxu0 0.0
        %947 = vmatpush1.msra.mxu0 0.0
        %948 = vmatprep.subr.mxu0 0.0
        %949 = vmatpush1.msra.mxu0 0.0
        %950 = vmatprep.subr.mxu0 0.0
        %951 = vmatpush1.msra.mxu0 0.0
        %952 = vmatprep.subr.mxu0 0.0
        %953 = vmatpush1.msra.mxu0 0.0
        %954 = vmatprep.subr.mxu0 0.0
        %955 = vmatpush1.msra.mxu0 0.0
        %956 = vmatprep.subr.mxu0 0.0
        %957 = vmatpush1.msra.mxu0 0.0
        %958 = vmatprep.subr.mxu0 0.0
        %959 = vmatpush1.msra.mxu0 0.0
        %960 = vmatprep.subr.mxu0 0.0
        %961 = vmatpush1.msra.mxu0 0.0
        %962 = vmatprep.subr.mxu0 0.0
        %963 = vmatpush1.msra.mxu0 0.0
        %964 = vmatprep.subr.mxu0 0.0
        %965 = vmatpush1.msra.mxu0 0.0
        %966 = vmatprep.subr.mxu0 0.0
        %967 = vmatpush1.msra.mxu0 0.0
        %968 = vmatprep.subr.mxu0 0.0
        %969 = vmatpush1.msra.mxu0 0.0
        %970 = vmatprep.subr.mxu0 0.0
        %971 = vmatpush1.msra.mxu0 0.0
        %972 = vmatprep.subr.mxu0 0.0
        %973 = vmatpush1.msra.mxu0 0.0
        %974 = vmatprep.mubr.f32.mxu0 0.0
        %975 = vmatmul.mubr.f32.gmra.mrb[0].mxu0 %v899
        %v976 = vpop.f32.mrb[0].mxu0
        %v977 = vadd.f32 0.0, %v976
        %v978 = vpop.f32.mrb[0].mxu0
        %v979 = vadd.f32 0.0, %v978
        %980 = vmatprep.mubr.f32.mxu0 0.0
        %981 = vmatmul.mubr.f32.gmra.mrb[0].mxu0 %v902
        %v982 = vpop.f32.mrb[0].mxu0
        %v983 = vadd.f32 0.0, %v982
        %v984 = vpop.f32.mrb[0].mxu0
        %v985 = vadd.f32 0.0, %v984
        %986 = vmatprep.mubr.f32.mxu0 0.0
        %987 = vmatmul.mubr.f32.gmra.mrb[0].mxu0 %v905
        %v988 = vpop.f32.mrb[0].mxu0
        %v989 = vadd.f32 0.0, %v988
        %v990 = vpop.f32.mrb[0].mxu0
        %v991 = vadd.f32 0.0, %v990
        %992 = vmatprep.mubr.f32.mxu0 0.0
        %993 = vmatmul.mubr.f32.gmra.mrb[0].mxu0 %v908
        %v994 = vpop.f32.mrb[0].mxu0
        %v995 = vadd.f32 0.0, %v994
        %v996 = vpop.f32.mrb[0].mxu0
        %v997 = vadd.f32 0.0, %v996
        %998 = vdwg.mxu0
        %999 = vmatprep.subr.mxu0 %v864
        %1000 = vmatpush1.msra.mxu0 %v863
        %1001 = vmatprep.subr.mxu0 %v872
        %1002 = vmatpush1.msra.mxu0 %v871
        %1003 = vmatprep.subr.mxu0 %v880
        %1004 = vmatpush1.msra.mxu0 %v879
        %1005 = vmatprep.subr.mxu0 %v888
        %1006 = vmatpush1.msra.mxu0 %v887
        %1007 = vmatprep.subr.mxu0 0.0
        %1008 = vmatpush1.msra.mxu0 0.0
        %1009 = vmatprep.subr.mxu0 0.0
        %1010 = vmatpush1.msra.mxu0 0.0
        %1011 = vmatprep.subr.mxu0 0.0
        %1012 = vmatpush1.msra.mxu0 0.0
        %1013 = vmatprep.subr.mxu0 0.0
        %1014 = vmatpush1.msra.mxu0 0.0
        %1015 = vmatprep.subr.mxu0 0.0
        %1016 = vmatpush1.msra.mxu0 0.0
        %1017 = vmatprep.subr.mxu0 0.0
        %1018 = vmatpush1.msra.mxu0 0.0
        %1019 = vmatprep.subr.mxu0 0.0
        %1020 = vmatpush1.msra.mxu0 0.0
        %1021 = vmatprep.subr.mxu0 0.0
        %1022 = vmatpush1.msra.mxu0 0.0
        %1023 = vmatprep.subr.mxu0 0.0
        %1024 = vmatpush1.msra.mxu0 0.0
        %1025 = vmatprep.subr.mxu0 0.0
        %1026 = vmatpush1.msra.mxu0 0.0
        %1027 = vmatprep.subr.mxu0 0.0
        %1028 = vmatpush1.msra.mxu0 0.0
        %1029 = vmatprep.subr.mxu0 0.0
        %1030 = vmatpush1.msra.mxu0 0.0
        %1031 = vmatprep.subr.mxu0 0.0
        %1032 = vmatpush1.msra.mxu0 0.0
        %1033 = vmatprep.subr.mxu0 0.0
        %1034 = vmatpush1.msra.mxu0 0.0
        %1035 = vmatprep.subr.mxu0 0.0
        %1036 = vmatpush1.msra.mxu0 0.0
        %1037 = vmatprep.subr.mxu0 0.0
        %1038 = vmatpush1.msra.mxu0 0.0
        %1039 = vmatprep.subr.mxu0 0.0
        %1040 = vmatpush1.msra.mxu0 0.0
        %1041 = vmatprep.subr.mxu0 0.0
        %1042 = vmatpush1.msra.mxu0 0.0
        %1043 = vmatprep.subr.mxu0 0.0
        %1044 = vmatpush1.msra.mxu0 0.0
        %1045 = vmatprep.subr.mxu0 0.0
        %1046 = vmatpush1.msra.mxu0 0.0
        %1047 = vmatprep.subr.mxu0 0.0
        %1048 = vmatpush1.msra.mxu0 0.0
        %1049 = vmatprep.subr.mxu0 0.0
        %1050 = vmatpush1.msra.mxu0 0.0
        %1051 = vmatprep.subr.mxu0 0.0
        %1052 = vmatpush1.msra.mxu0 0.0
        %1053 = vmatprep.subr.mxu0 0.0
        %1054 = vmatpush1.msra.mxu0 0.0
        %1055 = vmatprep.subr.mxu0 0.0
        %1056 = vmatpush1.msra.mxu0 0.0
        %1057 = vmatprep.subr.mxu0 0.0
        %1058 = vmatpush1.msra.mxu0 0.0
        %1059 = vmatprep.subr.mxu0 0.0
        %1060 = vmatpush1.msra.mxu0 0.0
        %1061 = vmatprep.subr.mxu0 0.0
        %1062 = vmatpush1.msra.mxu0 0.0
        %1063 = vmatprep.mubr.f32.mxu0 0.0
        %1064 = vmatmul.mubr.f32.gmra.mrb[0].mxu0 %v899
        %v1065 = vpop.f32.mrb[0].mxu0
        %v1066 = vadd.f32 0.0, %v1065
        %v1067 = vpop.f32.mrb[0].mxu0
        %v1068 = vadd.f32 0.0, %v1067
        %1069 = vmatprep.mubr.f32.mxu0 0.0
        %1070 = vmatmul.mubr.f32.gmra.mrb[0].mxu0 %v902
        %v1071 = vpop.f32.mrb[0].mxu0
        %v1072 = vadd.f32 0.0, %v1071
        %v1073 = vpop.f32.mrb[0].mxu0
        %v1074 = vadd.f32 0.0, %v1073
        %1075 = vmatprep.mubr.f32.mxu0 0.0
        %1076 = vmatmul.mubr.f32.gmra.mrb[0].mxu0 %v905
        %v1077 = vpop.f32.mrb[0].mxu0
        %v1078 = vadd.f32 0.0, %v1077
        %v1079 = vpop.f32.mrb[0].mxu0
        %v1080 = vadd.f32 0.0, %v1079
        %1081 = vmatprep.mubr.f32.mxu0 0.0
        %1082 = vmatmul.mubr.f32.gmra.mrb[0].mxu0 %v908
        %v1083 = vpop.f32.mrb[0].mxu0
        %v1084 = vadd.f32 0.0, %v1083
        %v1085 = vpop.f32.mrb[0].mxu0
        %v1086 = vadd.f32 0.0, %v1085
        %1087 = vdwg.mxu0
        %1088 = vmatprep.subr.mxu0 %v866
        %1089 = vmatpush1.msra.mxu0 %v865
        %1090 = vmatprep.subr.mxu0 %v874
        %1091 = vmatpush1.msra.mxu0 %v873
        %1092 = vmatprep.subr.mxu0 %v882
        %1093 = vmatpush1.msra.mxu0 %v881
        %1094 = vmatprep.subr.mxu0 %v890
        %1095 = vmatpush1.msra.mxu0 %v889
        %1096 = vmatprep.subr.mxu0 0.0
        %1097 = vmatpush1.msra.mxu0 0.0
        %1098 = vmatprep.subr.mxu0 0.0
        %1099 = vmatpush1.msra.mxu0 0.0
        %1100 = vmatprep.subr.mxu0 0.0
        %1101 = vmatpush1.msra.mxu0 0.0
        %1102 = vmatprep.subr.mxu0 0.0
        %1103 = vmatpush1.msra.mxu0 0.0
        %1104 = vmatprep.subr.mxu0 0.0
        %1105 = vmatpush1.msra.mxu0 0.0
        %1106 = vmatprep.subr.mxu0 0.0
        %1107 = vmatpush1.msra.mxu0 0.0
        %1108 = vmatprep.subr.mxu0 0.0
        %1109 = vmatpush1.msra.mxu0 0.0
        %1110 = vmatprep.subr.mxu0 0.0
        %1111 = vmatpush1.msra.mxu0 0.0
        %1112 = vmatprep.subr.mxu0 0.0
        %1113 = vmatpush1.msra.mxu0 0.0
        %1114 = vmatprep.subr.mxu0 0.0
        %1115 = vmatpush1.msra.mxu0 0.0
        %1116 = vmatprep.subr.mxu0 0.0
        %1117 = vmatpush1.msra.mxu0 0.0
        %1118 = vmatprep.subr.mxu0 0.0
        %1119 = vmatpush1.msra.mxu0 0.0
        %1120 = vmatprep.subr.mxu0 0.0
        %1121 = vmatpush1.msra.mxu0 0.0
        %1122 = vmatprep.subr.mxu0 0.0
        %1123 = vmatpush1.msra.mxu0 0.0
        %1124 = vmatprep.subr.mxu0 0.0
        %1125 = vmatpush1.msra.mxu0 0.0
        %1126 = vmatprep.subr.mxu0 0.0
        %1127 = vmatpush1.msra.mxu0 0.0
        %1128 = vmatprep.subr.mxu0 0.0
        %1129 = vmatpush1.msra.mxu0 0.0
        %1130 = vmatprep.subr.mxu0 0.0
        %1131 = vmatpush1.msra.mxu0 0.0
        %1132 = vmatprep.subr.mxu0 0.0
        %1133 = vmatpush1.msra.mxu0 0.0
        %1134 = vmatprep.subr.mxu0 0.0
        %1135 = vmatpush1.msra.mxu0 0.0
        %1136 = vmatprep.subr.mxu0 0.0
        %1137 = vmatpush1.msra.mxu0 0.0
        %1138 = vmatprep.subr.mxu0 0.0
        %1139 = vmatpush1.msra.mxu0 0.0
        %1140 = vmatprep.subr.mxu0 0.0
        %1141 = vmatpush1.msra.mxu0 0.0
        %1142 = vmatprep.subr.mxu0 0.0
        %1143 = vmatpush1.msra.mxu0 0.0
        %1144 = vmatprep.subr.mxu0 0.0
        %1145 = vmatpush1.msra.mxu0 0.0
        %1146 = vmatprep.subr.mxu0 0.0
        %1147 = vmatpush1.msra.mxu0 0.0
        %1148 = vmatprep.subr.mxu0 0.0
        %1149 = vmatpush1.msra.mxu0 0.0
        %1150 = vmatprep.subr.mxu0 0.0
        %1151 = vmatpush1.msra.mxu0 0.0
        %1152 = vmatprep.mubr.f32.mxu0 0.0
        %1153 = vmatmul.mubr.f32.gmra.mrb[0].mxu0 %v899
        %v1154 = vpop.f32.mrb[0].mxu0
        %v1155 = vadd.f32 0.0, %v1154
        %v1156 = vpop.f32.mrb[0].mxu0
        %v1157 = vadd.f32 0.0, %v1156
        %1158 = vmatprep.mubr.f32.mxu0 0.0
        %1159 = vmatmul.mubr.f32.gmra.mrb[0].mxu0 %v902
        %v1160 = vpop.f32.mrb[0].mxu0
        %v1161 = vadd.f32 0.0, %v1160
        %v1162 = vpop.f32.mrb[0].mxu0
        %v1163 = vadd.f32 0.0, %v1162
        %1164 = vmatprep.mubr.f32.mxu0 0.0
        %1165 = vmatmul.mubr.f32.gmra.mrb[0].mxu0 %v905
        %v1166 = vpop.f32.mrb[0].mxu0
        %v1167 = vadd.f32 0.0, %v1166
        %v1168 = vpop.f32.mrb[0].mxu0
        %v1169 = vadd.f32 0.0, %v1168
        %1170 = vmatprep.mubr.f32.mxu0 0.0
        %1171 = vmatmul.mubr.f32.gmra.mrb[0].mxu0 %v908
        %v1172 = vpop.f32.mrb[0].mxu0
        %v1173 = vadd.f32 0.0, %v1172
        %v1174 = vpop.f32.mrb[0].mxu0
        %v1175 = vadd.f32 0.0, %v1174
        %1176 = vdwg.mxu0
        %1177 = vmatprep.subr.mxu0 %v868
        %1178 = vmatpush1.msra.mxu0 %v867
        %1179 = vmatprep.subr.mxu0 %v876
        %1180 = vmatpush1.msra.mxu0 %v875
        %1181 = vmatprep.subr.mxu0 %v884
        %1182 = vmatpush1.msra.mxu0 %v883
        %1183 = vmatprep.subr.mxu0 %v892
        %1184 = vmatpush1.msra.mxu0 %v891
        %1185 = vmatprep.subr.mxu0 0.0
        %1186 = vmatpush1.msra.mxu0 0.0
        %1187 = vmatprep.subr.mxu0 0.0
        %1188 = vmatpush1.msra.mxu0 0.0
        %1189 = vmatprep.subr.mxu0 0.0
        %1190 = vmatpush1.msra.mxu0 0.0
        %1191 = vmatprep.subr.mxu0 0.0
        %1192 = vmatpush1.msra.mxu0 0.0
        %1193 = vmatprep.subr.mxu0 0.0
        %1194 = vmatpush1.msra.mxu0 0.0
        %1195 = vmatprep.subr.mxu0 0.0
        %1196 = vmatpush1.msra.mxu0 0.0
        %1197 = vmatprep.subr.mxu0 0.0
        %1198 = vmatpush1.msra.mxu0 0.0
        %1199 = vmatprep.subr.mxu0 0.0
        %1200 = vmatpush1.msra.mxu0 0.0
        %1201 = vmatprep.subr.mxu0 0.0
        %1202 = vmatpush1.msra.mxu0 0.0
        %1203 = vmatprep.subr.mxu0 0.0
        %1204 = vmatpush1.msra.mxu0 0.0
        %1205 = vmatprep.subr.mxu0 0.0
        %1206 = vmatpush1.msra.mxu0 0.0
        %1207 = vmatprep.subr.mxu0 0.0
        %1208 = vmatpush1.msra.mxu0 0.0
        %1209 = vmatprep.subr.mxu0 0.0
        %1210 = vmatpush1.msra.mxu0 0.0
        %1211 = vmatprep.subr.mxu0 0.0
        %1212 = vmatpush1.msra.mxu0 0.0
        %1213 = vmatprep.subr.mxu0 0.0
        %1214 = vmatpush1.msra.mxu0 0.0
        %1215 = vmatprep.subr.mxu0 0.0
        %1216 = vmatpush1.msra.mxu0 0.0
        %1217 = vmatprep.subr.mxu0 0.0
        %1218 = vmatpush1.msra.mxu0 0.0
        %1219 = vmatprep.subr.mxu0 0.0
        %1220 = vmatpush1.msra.mxu0 0.0
        %1221 = vmatprep.subr.mxu0 0.0
        %1222 = vmatpush1.msra.mxu0 0.0
        %1223 = vmatprep.subr.mxu0 0.0
        %1224 = vmatpush1.msra.mxu0 0.0
        %1225 = vmatprep.subr.mxu0 0.0
        %1226 = vmatpush1.msra.mxu0 0.0
        %1227 = vmatprep.subr.mxu0 0.0
        %1228 = vmatpush1.msra.mxu0 0.0
        %1229 = vmatprep.subr.mxu0 0.0
        %1230 = vmatpush1.msra.mxu0 0.0
        %1231 = vmatprep.subr.mxu0 0.0
        %1232 = vmatpush1.msra.mxu0 0.0
        %1233 = vmatprep.subr.mxu0 0.0
        %1234 = vmatpush1.msra.mxu0 0.0
        %1235 = vmatprep.subr.mxu0 0.0
        %1236 = vmatpush1.msra.mxu0 0.0
        %1237 = vmatprep.subr.mxu0 0.0
        %1238 = vmatpush1.msra.mxu0 0.0
        %1239 = vmatprep.subr.mxu0 0.0
        %1240 = vmatpush1.msra.mxu0 0.0
        %1241 = vmatprep.mubr.f32.mxu0 0.0
        %1242 = vmatmul.mubr.f32.gmra.mrb[0].mxu0 %v899
        %v1243 = vpop.f32.mrb[0].mxu0
        %v1244 = vadd.f32 0.0, %v1243
        %v1245 = vpop.f32.mrb[0].mxu0
        %v1246 = vadd.f32 0.0, %v1245
        %1247 = vmatprep.mubr.f32.mxu0 0.0
        %1248 = vmatmul.mubr.f32.gmra.mrb[0].mxu0 %v902
        %v1249 = vpop.f32.mrb[0].mxu0
        %v1250 = vadd.f32 0.0, %v1249
        %v1251 = vpop.f32.mrb[0].mxu0
        %v1252 = vadd.f32 0.0, %v1251
        %1253 = vmatprep.mubr.f32.mxu0 0.0
        %1254 = vmatmul.mubr.f32.gmra.mrb[0].mxu0 %v905
        %v1255 = vpop.f32.mrb[0].mxu0
        %v1256 = vadd.f32 0.0, %v1255
        %v1257 = vpop.f32.mrb[0].mxu0
        %v1258 = vadd.f32 0.0, %v1257
        %1259 = vmatprep.mubr.f32.mxu0 0.0
        %1260 = vmatmul.mubr.f32.gmra.mrb[0].mxu0 %v908
        %v1261 = vpop.f32.mrb[0].mxu0
        %v1262 = vadd.f32 0.0, %v1261
        %v1263 = vpop.f32.mrb[0].mxu0
        %v1264 = vadd.f32 0.0, %v1263
        %1265 = vdwg.mxu0
        %v1266 = vmax.f32 %v977, 0.0
        %v1267 = vmax.f32 %v979, 0.0
        %v1268 = vmax.f32 %v1066, 0.0
        %v1269 = vmax.f32 %v1068, 0.0
        %v1270 = vmax.f32 %v1155, 0.0
        %v1271 = vmax.f32 %v1157, 0.0
        %v1272 = vmax.f32 %v1244, 0.0
        %v1273 = vmax.f32 %v1246, 0.0
        %v1274 = vmax.f32 %v983, 0.0
        %v1275 = vmax.f32 %v985, 0.0
        %v1276 = vmax.f32 %v1072, 0.0
        %v1277 = vmax.f32 %v1074, 0.0
        %v1278 = vmax.f32 %v1161, 0.0
        %v1279 = vmax.f32 %v1163, 0.0
        %v1280 = vmax.f32 %v1250, 0.0
        %v1281 = vmax.f32 %v1252, 0.0
        %v1282 = vmax.f32 %v989, 0.0
        %v1283 = vmax.f32 %v991, 0.0
        %v1284 = vmax.f32 %v1078, 0.0
        %v1285 = vmax.f32 %v1080, 0.0
        %v1286 = vmax.f32 %v1167, 0.0
        %v1287 = vmax.f32 %v1169, 0.0
        %v1288 = vmax.f32 %v1256, 0.0
        %v1289 = vmax.f32 %v1258, 0.0
        %v1290 = vmax.f32 %v995, 0.0
        %v1291 = vmax.f32 %v997, 0.0
        %v1292 = vmax.f32 %v1084, 0.0
        %v1293 = vmax.f32 %v1086, 0.0
        %v1294 = vmax.f32 %v1173, 0.0
        %v1295 = vmax.f32 %v1175, 0.0
        %v1296 = vmax.f32 %v1262, 0.0
        %v1297 = vmax.f32 %v1264, 0.0
        %v1298 = vld [vmem:[#allocation10] sm:$0xff]
        %v1299 = vld [vmem:[#allocation10 + $0x8] sm:$0xff]
        %v1300 = vld [vmem:[#allocation10 + $0x10] sm:$0xff]
        %v1301 = vld [vmem:[#allocation10 + $0x18] sm:$0xff]
        %v1303 = vsel %vm897, %v1298, 0
        %v1306 = vsel %vm897, %v1299, 0
        %v1309 = vsel %vm897, %v1300, 0
        %v1312 = vsel %vm897, %v1301, 0
        %1314 = vmatprep.subr.mxu0 %v1267
        %1315 = vmatpush1.msra.mxu0 %v1266
        %1316 = vmatprep.subr.mxu0 %v1275
        %1317 = vmatpush1.msra.mxu0 %v1274
        %1318 = vmatprep.subr.mxu0 %v1283
        %1319 = vmatpush1.msra.mxu0 %v1282
        %1320 = vmatprep.subr.mxu0 %v1291
        %1321 = vmatpush1.msra.mxu0 %v1290
        %1322 = vmatprep.subr.mxu0 0.0
        %1323 = vmatpush1.msra.mxu0 0.0
        %1324 = vmatprep.subr.mxu0 0.0
        %1325 = vmatpush1.msra.mxu0 0.0
        %1326 = vmatprep.subr.mxu0 0.0
        %1327 = vmatpush1.msra.mxu0 0.0
        %1328 = vmatprep.subr.mxu0 0.0
        %1329 = vmatpush1.msra.mxu0 0.0
        %1330 = vmatprep.subr.mxu0 0.0
        %1331 = vmatpush1.msra.mxu0 0.0
        %1332 = vmatprep.subr.mxu0 0.0
        %1333 = vmatpush1.msra.mxu0 0.0
        %1334 = vmatprep.subr.mxu0 0.0
        %1335 = vmatpush1.msra.mxu0 0.0
        %1336 = vmatprep.subr.mxu0 0.0
        %1337 = vmatpush1.msra.mxu0 0.0
        %1338 = vmatprep.subr.mxu0 0.0
        %1339 = vmatpush1.msra.mxu0 0.0
        %1340 = vmatprep.subr.mxu0 0.0
        %1341 = vmatpush1.msra.mxu0 0.0
        %1342 = vmatprep.subr.mxu0 0.0
        %1343 = vmatpush1.msra.mxu0 0.0
        %1344 = vmatprep.subr.mxu0 0.0
        %1345 = vmatpush1.msra.mxu0 0.0
        %1346 = vmatprep.subr.mxu0 0.0
        %1347 = vmatpush1.msra.mxu0 0.0
        %1348 = vmatprep.subr.mxu0 0.0
        %1349 = vmatpush1.msra.mxu0 0.0
        %1350 = vmatprep.subr.mxu0 0.0
        %1351 = vmatpush1.msra.mxu0 0.0
        %1352 = vmatprep.subr.mxu0 0.0
        %1353 = vmatpush1.msra.mxu0 0.0
        %1354 = vmatprep.subr.mxu0 0.0
        %1355 = vmatpush1.msra.mxu0 0.0
        %1356 = vmatprep.subr.mxu0 0.0
        %1357 = vmatpush1.msra.mxu0 0.0
        %1358 = vmatprep.subr.mxu0 0.0
        %1359 = vmatpush1.msra.mxu0 0.0
        %1360 = vmatprep.subr.mxu0 0.0
        %1361 = vmatpush1.msra.mxu0 0.0
        %1362 = vmatprep.subr.mxu0 0.0
        %1363 = vmatpush1.msra.mxu0 0.0
        %1364 = vmatprep.subr.mxu0 0.0
        %1365 = vmatpush1.msra.mxu0 0.0
        %1366 = vmatprep.subr.mxu0 0.0
        %1367 = vmatpush1.msra.mxu0 0.0
        %1368 = vmatprep.subr.mxu0 0.0
        %1369 = vmatpush1.msra.mxu0 0.0
        %1370 = vmatprep.subr.mxu0 0.0
        %1371 = vmatpush1.msra.mxu0 0.0
        %1372 = vmatprep.subr.mxu0 0.0
        %1373 = vmatpush1.msra.mxu0 0.0
        %1374 = vmatprep.subr.mxu0 0.0
        %1375 = vmatpush1.msra.mxu0 0.0
        %1376 = vmatprep.subr.mxu0 0.0
        %1377 = vmatpush1.msra.mxu0 0.0
        %1378 = vmatprep.mubr.f32.mxu0 0.0
        %1379 = vmatmul.mubr.f32.gmra.mrb[0].mxu0 %v1303
        %v1380 = vpop.f32.mrb[0].mxu0
        %v1381 = vadd.f32 0.0, %v1380
        %v1382 = vpop.f32.mrb[0].mxu0
        %v1383 = vadd.f32 0.0, %v1382
        %1384 = vmatprep.mubr.f32.mxu0 0.0
        %1385 = vmatmul.mubr.f32.gmra.mrb[0].mxu0 %v1306
        %v1386 = vpop.f32.mrb[0].mxu0
        %v1387 = vadd.f32 0.0, %v1386
        %v1388 = vpop.f32.mrb[0].mxu0
        %v1389 = vadd.f32 0.0, %v1388
        %1390 = vmatprep.mubr.f32.mxu0 0.0
        %1391 = vmatmul.mubr.f32.gmra.mrb[0].mxu0 %v1309
        %v1392 = vpop.f32.mrb[0].mxu0
        %v1393 = vadd.f32 0.0, %v1392
        %v1394 = vpop.f32.mrb[0].mxu0
        %v1395 = vadd.f32 0.0, %v1394
        %1396 = vmatprep.mubr.f32.mxu0 0.0
        %1397 = vmatmul.mubr.f32.gmra.mrb[0].mxu0 %v1312
        %v1398 = vpop.f32.mrb[0].mxu0
        %v1399 = vadd.f32 0.0, %v1398
        %v1400 = vpop.f32.mrb[0].mxu0
        %v1401 = vadd.f32 0.0, %v1400
        %1402 = vdwg.mxu0
        %1403 = vmatprep.subr.mxu0 %v1269
        %1404 = vmatpush1.msra.mxu0 %v1268
        %1405 = vmatprep.subr.mxu0 %v1277
        %1406 = vmatpush1.msra.mxu0 %v1276
        %1407 = vmatprep.subr.mxu0 %v1285
        %1408 = vmatpush1.msra.mxu0 %v1284
        %1409 = vmatprep.subr.mxu0 %v1293
        %1410 = vmatpush1.msra.mxu0 %v1292
        %1411 = vmatprep.subr.mxu0 0.0
        %1412 = vmatpush1.msra.mxu0 0.0
        %1413 = vmatprep.subr.mxu0 0.0
        %1414 = vmatpush1.msra.mxu0 0.0
        %1415 = vmatprep.subr.mxu0 0.0
        %1416 = vmatpush1.msra.mxu0 0.0
        %1417 = vmatprep.subr.mxu0 0.0
        %1418 = vmatpush1.msra.mxu0 0.0
        %1419 = vmatprep.subr.mxu0 0.0
        %1420 = vmatpush1.msra.mxu0 0.0
        %1421 = vmatprep.subr.mxu0 0.0
        %1422 = vmatpush1.msra.mxu0 0.0
        %1423 = vmatprep.subr.mxu0 0.0
        %1424 = vmatpush1.msra.mxu0 0.0
        %1425 = vmatprep.subr.mxu0 0.0
        %1426 = vmatpush1.msra.mxu0 0.0
        %1427 = vmatprep.subr.mxu0 0.0
        %1428 = vmatpush1.msra.mxu0 0.0
        %1429 = vmatprep.subr.mxu0 0.0
        %1430 = vmatpush1.msra.mxu0 0.0
        %1431 = vmatprep.subr.mxu0 0.0
        %1432 = vmatpush1.msra.mxu0 0.0
        %1433 = vmatprep.subr.mxu0 0.0
        %1434 = vmatpush1.msra.mxu0 0.0
        %1435 = vmatprep.subr.mxu0 0.0
        %1436 = vmatpush1.msra.mxu0 0.0
        %1437 = vmatprep.subr.mxu0 0.0
        %1438 = vmatpush1.msra.mxu0 0.0
        %1439 = vmatprep.subr.mxu0 0.0
        %1440 = vmatpush1.msra.mxu0 0.0
        %1441 = vmatprep.subr.mxu0 0.0
        %1442 = vmatpush1.msra.mxu0 0.0
        %1443 = vmatprep.subr.mxu0 0.0
        %1444 = vmatpush1.msra.mxu0 0.0
        %1445 = vmatprep.subr.mxu0 0.0
        %1446 = vmatpush1.msra.mxu0 0.0
        %1447 = vmatprep.subr.mxu0 0.0
        %1448 = vmatpush1.msra.mxu0 0.0
        %1449 = vmatprep.subr.mxu0 0.0
        %1450 = vmatpush1.msra.mxu0 0.0
        %1451 = vmatprep.subr.mxu0 0.0
        %1452 = vmatpush1.msra.mxu0 0.0
        %1453 = vmatprep.subr.mxu0 0.0
        %1454 = vmatpush1.msra.mxu0 0.0
        %1455 = vmatprep.subr.mxu0 0.0
        %1456 = vmatpush1.msra.mxu0 0.0
        %1457 = vmatprep.subr.mxu0 0.0
        %1458 = vmatpush1.msra.mxu0 0.0
        %1459 = vmatprep.subr.mxu0 0.0
        %1460 = vmatpush1.msra.mxu0 0.0
        %1461 = vmatprep.subr.mxu0 0.0
        %1462 = vmatpush1.msra.mxu0 0.0
        %1463 = vmatprep.subr.mxu0 0.0
        %1464 = vmatpush1.msra.mxu0 0.0
        %1465 = vmatprep.subr.mxu0 0.0
        %1466 = vmatpush1.msra.mxu0 0.0
        %1467 = vmatprep.mubr.f32.mxu0 0.0
        %1468 = vmatmul.mubr.f32.gmra.mrb[0].mxu0 %v1303
        %v1469 = vpop.f32.mrb[0].mxu0
        %v1470 = vadd.f32 0.0, %v1469
        %v1471 = vpop.f32.mrb[0].mxu0
        %v1472 = vadd.f32 0.0, %v1471
        %1473 = vmatprep.mubr.f32.mxu0 0.0
        %1474 = vmatmul.mubr.f32.gmra.mrb[0].mxu0 %v1306
        %v1475 = vpop.f32.mrb[0].mxu0
        %v1476 = vadd.f32 0.0, %v1475
        %v1477 = vpop.f32.mrb[0].mxu0
        %v1478 = vadd.f32 0.0, %v1477
        %1479 = vmatprep.mubr.f32.mxu0 0.0
        %1480 = vmatmul.mubr.f32.gmra.mrb[0].mxu0 %v1309
        %v1481 = vpop.f32.mrb[0].mxu0
        %v1482 = vadd.f32 0.0, %v1481
        %v1483 = vpop.f32.mrb[0].mxu0
        %v1484 = vadd.f32 0.0, %v1483
        %1485 = vmatprep.mubr.f32.mxu0 0.0
        %1486 = vmatmul.mubr.f32.gmra.mrb[0].mxu0 %v1312
        %v1487 = vpop.f32.mrb[0].mxu0
        %v1488 = vadd.f32 0.0, %v1487
        %v1489 = vpop.f32.mrb[0].mxu0
        %v1490 = vadd.f32 0.0, %v1489
        %1491 = vdwg.mxu0
        %1492 = vmatprep.subr.mxu0 %v1271
        %1493 = vmatpush1.msra.mxu0 %v1270
        %1494 = vmatprep.subr.mxu0 %v1279
        %1495 = vmatpush1.msra.mxu0 %v1278
        %1496 = vmatprep.subr.mxu0 %v1287
        %1497 = vmatpush1.msra.mxu0 %v1286
        %1498 = vmatprep.subr.mxu0 %v1295
        %1499 = vmatpush1.msra.mxu0 %v1294
        %1500 = vmatprep.subr.mxu0 0.0
        %1501 = vmatpush1.msra.mxu0 0.0
        %1502 = vmatprep.subr.mxu0 0.0
        %1503 = vmatpush1.msra.mxu0 0.0
        %1504 = vmatprep.subr.mxu0 0.0
        %1505 = vmatpush1.msra.mxu0 0.0
        %1506 = vmatprep.subr.mxu0 0.0
        %1507 = vmatpush1.msra.mxu0 0.0
        %1508 = vmatprep.subr.mxu0 0.0
        %1509 = vmatpush1.msra.mxu0 0.0
        %1510 = vmatprep.subr.mxu0 0.0
        %1511 = vmatpush1.msra.mxu0 0.0
        %1512 = vmatprep.subr.mxu0 0.0
        %1513 = vmatpush1.msra.mxu0 0.0
        %1514 = vmatprep.subr.mxu0 0.0
        %1515 = vmatpush1.msra.mxu0 0.0
        %1516 = vmatprep.subr.mxu0 0.0
        %1517 = vmatpush1.msra.mxu0 0.0
        %1518 = vmatprep.subr.mxu0 0.0
        %1519 = vmatpush1.msra.mxu0 0.0
        %1520 = vmatprep.subr.mxu0 0.0
        %1521 = vmatpush1.msra.mxu0 0.0
        %1522 = vmatprep.subr.mxu0 0.0
        %1523 = vmatpush1.msra.mxu0 0.0
        %1524 = vmatprep.subr.mxu0 0.0
        %1525 = vmatpush1.msra.mxu0 0.0
        %1526 = vmatprep.subr.mxu0 0.0
        %1527 = vmatpush1.msra.mxu0 0.0
        %1528 = vmatprep.subr.mxu0 0.0
        %1529 = vmatpush1.msra.mxu0 0.0
        %1530 = vmatprep.subr.mxu0 0.0
        %1531 = vmatpush1.msra.mxu0 0.0
        %1532 = vmatprep.subr.mxu0 0.0
        %1533 = vmatpush1.msra.mxu0 0.0
        %1534 = vmatprep.subr.mxu0 0.0
        %1535 = vmatpush1.msra.mxu0 0.0
        %1536 = vmatprep.subr.mxu0 0.0
        %1537 = vmatpush1.msra.mxu0 0.0
        %1538 = vmatprep.subr.mxu0 0.0
        %1539 = vmatpush1.msra.mxu0 0.0
        %1540 = vmatprep.subr.mxu0 0.0
        %1541 = vmatpush1.msra.mxu0 0.0
        %1542 = vmatprep.subr.mxu0 0.0
        %1543 = vmatpush1.msra.mxu0 0.0
        %1544 = vmatprep.subr.mxu0 0.0
        %1545 = vmatpush1.msra.mxu0 0.0
        %1546 = vmatprep.subr.mxu0 0.0
        %1547 = vmatpush1.msra.mxu0 0.0
        %1548 = vmatprep.subr.mxu0 0.0
        %1549 = vmatpush1.msra.mxu0 0.0
        %1550 = vmatprep.subr.mxu0 0.0
        %1551 = vmatpush1.msra.mxu0 0.0
        %1552 = vmatprep.subr.mxu0 0.0
        %1553 = vmatpush1.msra.mxu0 0.0
        %1554 = vmatprep.subr.mxu0 0.0
        %1555 = vmatpush1.msra.mxu0 0.0
        %1556 = vmatprep.mubr.f32.mxu0 0.0
        %1557 = vmatmul.mubr.f32.gmra.mrb[0].mxu0 %v1303
        %v1558 = vpop.f32.mrb[0].mxu0
        %v1559 = vadd.f32 0.0, %v1558
        %v1560 = vpop.f32.mrb[0].mxu0
        %v1561 = vadd.f32 0.0, %v1560
        %1562 = vmatprep.mubr.f32.mxu0 0.0
        %1563 = vmatmul.mubr.f32.gmra.mrb[0].mxu0 %v1306
        %v1564 = vpop.f32.mrb[0].mxu0
        %v1565 = vadd.f32 0.0, %v1564
        %v1566 = vpop.f32.mrb[0].mxu0
        %v1567 = vadd.f32 0.0, %v1566
        %1568 = vmatprep.mubr.f32.mxu0 0.0
        %1569 = vmatmul.mubr.f32.gmra.mrb[0].mxu0 %v1309
        %v1570 = vpop.f32.mrb[0].mxu0
        %v1571 = vadd.f32 0.0, %v1570
        %v1572 = vpop.f32.mrb[0].mxu0
        %v1573 = vadd.f32 0.0, %v1572
        %1574 = vmatprep.mubr.f32.mxu0 0.0
        %1575 = vmatmul.mubr.f32.gmra.mrb[0].mxu0 %v1312
        %v1576 = vpop.f32.mrb[0].mxu0
        %v1577 = vadd.f32 0.0, %v1576
        %v1578 = vpop.f32.mrb[0].mxu0
        %v1579 = vadd.f32 0.0, %v1578
        %1580 = vdwg.mxu0
        %1581 = vmatprep.subr.mxu0 %v1273
        %1582 = vmatpush1.msra.mxu0 %v1272
        %1583 = vmatprep.subr.mxu0 %v1281
        %1584 = vmatpush1.msra.mxu0 %v1280
        %1585 = vmatprep.subr.mxu0 %v1289
        %1586 = vmatpush1.msra.mxu0 %v1288
        %1587 = vmatprep.subr.mxu0 %v1297
        %1588 = vmatpush1.msra.mxu0 %v1296
        %1589 = vmatprep.subr.mxu0 0.0
        %1590 = vmatpush1.msra.mxu0 0.0
        %1591 = vmatprep.subr.mxu0 0.0
        %1592 = vmatpush1.msra.mxu0 0.0
        %1593 = vmatprep.subr.mxu0 0.0
        %1594 = vmatpush1.msra.mxu0 0.0
        %1595 = vmatprep.subr.mxu0 0.0
        %1596 = vmatpush1.msra.mxu0 0.0
        %1597 = vmatprep.subr.mxu0 0.0
        %1598 = vmatpush1.msra.mxu0 0.0
        %1599 = vmatprep.subr.mxu0 0.0
        %1600 = vmatpush1.msra.mxu0 0.0
        %1601 = vmatprep.subr.mxu0 0.0
        %1602 = vmatpush1.msra.mxu0 0.0
        %1603 = vmatprep.subr.mxu0 0.0
        %1604 = vmatpush1.msra.mxu0 0.0
        %1605 = vmatprep.subr.mxu0 0.0
        %1606 = vmatpush1.msra.mxu0 0.0
        %1607 = vmatprep.subr.mxu0 0.0
        %1608 = vmatpush1.msra.mxu0 0.0
        %1609 = vmatprep.subr.mxu0 0.0
        %1610 = vmatpush1.msra.mxu0 0.0
        %1611 = vmatprep.subr.mxu0 0.0
        %1612 = vmatpush1.msra.mxu0 0.0
        %1613 = vmatprep.subr.mxu0 0.0
        %1614 = vmatpush1.msra.mxu0 0.0
        %1615 = vmatprep.subr.mxu0 0.0
        %1616 = vmatpush1.msra.mxu0 0.0
        %1617 = vmatprep.subr.mxu0 0.0
        %1618 = vmatpush1.msra.mxu0 0.0
        %1619 = vmatprep.subr.mxu0 0.0
        %1620 = vmatpush1.msra.mxu0 0.0
        %1621 = vmatprep.subr.mxu0 0.0
        %1622 = vmatpush1.msra.mxu0 0.0
        %1623 = vmatprep.subr.mxu0 0.0
        %1624 = vmatpush1.msra.mxu0 0.0
        %1625 = vmatprep.subr.mxu0 0.0
        %1626 = vmatpush1.msra.mxu0 0.0
        %1627 = vmatprep.subr.mxu0 0.0
        %1628 = vmatpush1.msra.mxu0 0.0
        %1629 = vmatprep.subr.mxu0 0.0
        %1630 = vmatpush1.msra.mxu0 0.0
        %1631 = vmatprep.subr.mxu0 0.0
        %1632 = vmatpush1.msra.mxu0 0.0
        %1633 = vmatprep.subr.mxu0 0.0
        %1634 = vmatpush1.msra.mxu0 0.0
        %1635 = vmatprep.subr.mxu0 0.0
        %1636 = vmatpush1.msra.mxu0 0.0
        %1637 = vmatprep.subr.mxu0 0.0
        %1638 = vmatpush1.msra.mxu0 0.0
        %1639 = vmatprep.subr.mxu0 0.0
        %1640 = vmatpush1.msra.mxu0 0.0
        %1641 = vmatprep.subr.mxu0 0.0
        %1642 = vmatpush1.msra.mxu0 0.0
        %1643 = vmatprep.subr.mxu0 0.0
        %1644 = vmatpush1.msra.mxu0 0.0
        %1645 = vmatprep.mubr.f32.mxu0 0.0
        %1646 = vmatmul.mubr.f32.gmra.mrb[0].mxu0 %v1303
        %v1647 = vpop.f32.mrb[0].mxu0
        %v1648 = vadd.f32 0.0, %v1647
        %v1649 = vpop.f32.mrb[0].mxu0
        %v1650 = vadd.f32 0.0, %v1649
        %1651 = vmatprep.mubr.f32.mxu0 0.0
        %1652 = vmatmul.mubr.f32.gmra.mrb[0].mxu0 %v1306
        %v1653 = vpop.f32.mrb[0].mxu0
        %v1654 = vadd.f32 0.0, %v1653
        %v1655 = vpop.f32.mrb[0].mxu0
        %v1656 = vadd.f32 0.0, %v1655
        %1657 = vmatprep.mubr.f32.mxu0 0.0
        %1658 = vmatmul.mubr.f32.gmra.mrb[0].mxu0 %v1309
        %v1659 = vpop.f32.mrb[0].mxu0
        %v1660 = vadd.f32 0.0, %v1659
        %v1661 = vpop.f32.mrb[0].mxu0
        %v1662 = vadd.f32 0.0, %v1661
        %1663 = vmatprep.mubr.f32.mxu0 0.0
        %1664 = vmatmul.mubr.f32.gmra.mrb[0].mxu0 %v1312
        %v1665 = vpop.f32.mrb[0].mxu0
        %v1666 = vadd.f32 0.0, %v1665
        %v1667 = vpop.f32.mrb[0].mxu0
        %v1668 = vadd.f32 0.0, %v1667
        %1669 = vdwg.mxu0
        %v1670 = vmax.f32 %v1381, 0.0
        %v1671 = vmax.f32 %v1383, 0.0
        %v1672 = vmax.f32 %v1470, 0.0
        %v1673 = vmax.f32 %v1472, 0.0
        %v1674 = vmax.f32 %v1559, 0.0
        %v1675 = vmax.f32 %v1561, 0.0
        %v1676 = vmax.f32 %v1648, 0.0
        %v1677 = vmax.f32 %v1650, 0.0
        %v1678 = vmax.f32 %v1387, 0.0
        %v1679 = vmax.f32 %v1389, 0.0
        %v1680 = vmax.f32 %v1476, 0.0
        %v1681 = vmax.f32 %v1478, 0.0
        %v1682 = vmax.f32 %v1565, 0.0
        %v1683 = vmax.f32 %v1567, 0.0
        %v1684 = vmax.f32 %v1654, 0.0
        %v1685 = vmax.f32 %v1656, 0.0
        %v1686 = vmax.f32 %v1393, 0.0
        %v1687 = vmax.f32 %v1395, 0.0
        %v1688 = vmax.f32 %v1482, 0.0
        %v1689 = vmax.f32 %v1484, 0.0
        %v1690 = vmax.f32 %v1571, 0.0
        %v1691 = vmax.f32 %v1573, 0.0
        %v1692 = vmax.f32 %v1660, 0.0
        %v1693 = vmax.f32 %v1662, 0.0
        %v1694 = vmax.f32 %v1399, 0.0
        %v1695 = vmax.f32 %v1401, 0.0
        %v1696 = vmax.f32 %v1488, 0.0
        %v1697 = vmax.f32 %v1490, 0.0
        %v1698 = vmax.f32 %v1577, 0.0
        %v1699 = vmax.f32 %v1579, 0.0
        %v1700 = vmax.f32 %v1666, 0.0
        %v1701 = vmax.f32 %v1668, 0.0
        %v1702 = vld [vmem:[%s5] sm:$0xff]
        %s1703 = scalar_lea.vmem %s5, 8
        %v1704 = vld [vmem:[%s1703] sm:$0xff]
        %v1706 = vsel %vm897, %v1704, 0
        %1708 = vmatprep.subr.mxu0 0.0
        %1709 = vmatpush1.msra.mxu0 %v1671
        %1710 = vmatprep.subr.mxu0 0.0
        %1711 = vmatpush1.msra.mxu0 %v1679
        %1712 = vmatprep.subr.mxu0 0.0
        %1713 = vmatpush1.msra.mxu0 %v1687
        %1714 = vmatprep.subr.mxu0 0.0
        %1715 = vmatpush1.msra.mxu0 %v1695
        %1716 = vmatprep.subr.mxu0 0.0
        %1717 = vmatpush1.msra.mxu0 0.0
        %1718 = vmatprep.subr.mxu0 0.0
        %1719 = vmatpush1.msra.mxu0 0.0
        %1720 = vmatprep.subr.mxu0 0.0
        %1721 = vmatpush1.msra.mxu0 0.0
        %1722 = vmatprep.subr.mxu0 0.0
        %1723 = vmatpush1.msra.mxu0 0.0
        %1724 = vmatprep.subr.mxu0 0.0
        %1725 = vmatpush1.msra.mxu0 0.0
        %1726 = vmatprep.subr.mxu0 0.0
        %1727 = vmatpush1.msra.mxu0 0.0
        %1728 = vmatprep.subr.mxu0 0.0
        %1729 = vmatpush1.msra.mxu0 0.0
        %1730 = vmatprep.subr.mxu0 0.0
        %1731 = vmatpush1.msra.mxu0 0.0
        %1732 = vmatprep.subr.mxu0 0.0
        %1733 = vmatpush1.msra.mxu0 0.0
        %1734 = vmatprep.subr.mxu0 0.0
        %1735 = vmatpush1.msra.mxu0 0.0
        %1736 = vmatprep.subr.mxu0 0.0
        %1737 = vmatpush1.msra.mxu0 0.0
        %1738 = vmatprep.subr.mxu0 0.0
        %1739 = vmatpush1.msra.mxu0 0.0
        %1740 = vmatprep.subr.mxu0 0.0
        %1741 = vmatpush1.msra.mxu0 0.0
        %1742 = vmatprep.subr.mxu0 0.0
        %1743 = vmatpush1.msra.mxu0 0.0
        %1744 = vmatprep.subr.mxu0 0.0
        %1745 = vmatpush1.msra.mxu0 0.0
        %1746 = vmatprep.subr.mxu0 0.0
        %1747 = vmatpush1.msra.mxu0 0.0
        %1748 = vmatprep.subr.mxu0 0.0
        %1749 = vmatpush1.msra.mxu0 0.0
        %1750 = vmatprep.subr.mxu0 0.0
        %1751 = vmatpush1.msra.mxu0 0.0
        %1752 = vmatprep.subr.mxu0 0.0
        %1753 = vmatpush1.msra.mxu0 0.0
        %1754 = vmatprep.subr.mxu0 0.0
        %1755 = vmatpush1.msra.mxu0 0.0
        %1756 = vmatprep.subr.mxu0 0.0
        %1757 = vmatpush1.msra.mxu0 0.0
        %1758 = vmatprep.subr.mxu0 0.0
        %1759 = vmatpush1.msra.mxu0 0.0
        %1760 = vmatprep.subr.mxu0 0.0
        %1761 = vmatpush1.msra.mxu0 0.0
        %1762 = vmatprep.subr.mxu0 0.0
        %1763 = vmatpush1.msra.mxu0 0.0
        %1764 = vmatprep.subr.mxu0 0.0
        %1765 = vmatpush1.msra.mxu0 0.0
        %1766 = vmatprep.subr.mxu0 0.0
        %1767 = vmatpush1.msra.mxu0 0.0
        %1768 = vmatprep.subr.mxu0 0.0
        %1769 = vmatpush1.msra.mxu0 0.0
        %1770 = vmatprep.subr.mxu0 0.0
        %1771 = vmatpush1.msra.mxu0 0.0
        %1772 = vmatprep.mubr.f32.mxu0 0.0
        %1773 = vmatmul.mubr.f32.gmra.mrb[0].mxu0 %v1706
        %v1774 = vpop.f32.mrb[0].mxu0
        %v1775 = vadd.f32 0.0, %v1774
        %v1776 = vpop.f32.mrb[0].mxu0
        %1777 = vdwg.mxu0
        %v1779 = vsel %vm897, %v1702, 0
        %1781 = vmatprep.subr.mxu0 0.0
        %1782 = vmatpush1.msra.mxu0 %v1670
        %1783 = vmatprep.subr.mxu0 0.0
        %1784 = vmatpush1.msra.mxu0 %v1678
        %1785 = vmatprep.subr.mxu0 0.0
        %1786 = vmatpush1.msra.mxu0 %v1686
        %1787 = vmatprep.subr.mxu0 0.0
        %1788 = vmatpush1.msra.mxu0 %v1694
        %1789 = vmatprep.subr.mxu0 0.0
        %1790 = vmatpush1.msra.mxu0 0.0
        %1791 = vmatprep.subr.mxu0 0.0
        %1792 = vmatpush1.msra.mxu0 0.0
        %1793 = vmatprep.subr.mxu0 0.0
        %1794 = vmatpush1.msra.mxu0 0.0
        %1795 = vmatprep.subr.mxu0 0.0
        %1796 = vmatpush1.msra.mxu0 0.0
        %1797 = vmatprep.subr.mxu0 0.0
        %1798 = vmatpush1.msra.mxu0 0.0
        %1799 = vmatprep.subr.mxu0 0.0
        %1800 = vmatpush1.msra.mxu0 0.0
        %1801 = vmatprep.subr.mxu0 0.0
        %1802 = vmatpush1.msra.mxu0 0.0
        %1803 = vmatprep.subr.mxu0 0.0
        %1804 = vmatpush1.msra.mxu0 0.0
        %1805 = vmatprep.subr.mxu0 0.0
        %1806 = vmatpush1.msra.mxu0 0.0
        %1807 = vmatprep.subr.mxu0 0.0
        %1808 = vmatpush1.msra.mxu0 0.0
        %1809 = vmatprep.subr.mxu0 0.0
        %1810 = vmatpush1.msra.mxu0 0.0
        %1811 = vmatprep.subr.mxu0 0.0
        %1812 = vmatpush1.msra.mxu0 0.0
        %1813 = vmatprep.subr.mxu0 0.0
        %1814 = vmatpush1.msra.mxu0 0.0
        %1815 = vmatprep.subr.mxu0 0.0
        %1816 = vmatpush1.msra.mxu0 0.0
        %1817 = vmatprep.subr.mxu0 0.0
        %1818 = vmatpush1.msra.mxu0 0.0
        %1819 = vmatprep.subr.mxu0 0.0
        %1820 = vmatpush1.msra.mxu0 0.0
        %1821 = vmatprep.subr.mxu0 0.0
        %1822 = vmatpush1.msra.mxu0 0.0
        %1823 = vmatprep.subr.mxu0 0.0
        %1824 = vmatpush1.msra.mxu0 0.0
        %1825 = vmatprep.subr.mxu0 0.0
        %1826 = vmatpush1.msra.mxu0 0.0
        %1827 = vmatprep.subr.mxu0 0.0
        %1828 = vmatpush1.msra.mxu0 0.0
        %1829 = vmatprep.subr.mxu0 0.0
        %1830 = vmatpush1.msra.mxu0 0.0
        %1831 = vmatprep.subr.mxu0 0.0
        %1832 = vmatpush1.msra.mxu0 0.0
        %1833 = vmatprep.subr.mxu0 0.0
        %1834 = vmatpush1.msra.mxu0 0.0
        %1835 = vmatprep.subr.mxu0 0.0
        %1836 = vmatpush1.msra.mxu0 0.0
        %1837 = vmatprep.subr.mxu0 0.0
        %1838 = vmatpush1.msra.mxu0 0.0
        %1839 = vmatprep.subr.mxu0 0.0
        %1840 = vmatpush1.msra.mxu0 0.0
        %1841 = vmatprep.subr.mxu0 0.0
        %1842 = vmatpush1.msra.mxu0 0.0
        %1843 = vmatprep.subr.mxu0 0.0
        %1844 = vmatpush1.msra.mxu0 0.0
        %1845 = vmatprep.mubr.f32.mxu0 0.0
        %1846 = vmatmul.mubr.f32.gmra.mrb[0].mxu0 %v1779
        %v1847 = vpop.f32.mrb[0].mxu0
        %v1848 = vadd.f32 %v1775, %v1847
        %v1849 = vpop.f32.mrb[0].mxu0
        %1850 = vdwg.mxu0
        %s1851 = scalar_lea.vmem %s5, 16
        %v1852 = vld [vmem:[%s1851] sm:$0xff]
        %v1854 = vsel %vm897, %v1852, 0
        %1856 = vmatprep.subr.mxu0 0.0
        %1857 = vmatpush1.msra.mxu0 %v1672
        %1858 = vmatprep.subr.mxu0 0.0
        %1859 = vmatpush1.msra.mxu0 %v1680
        %1860 = vmatprep.subr.mxu0 0.0
        %1861 = vmatpush1.msra.mxu0 %v1688
        %1862 = vmatprep.subr.mxu0 0.0
        %1863 = vmatpush1.msra.mxu0 %v1696
        %1864 = vmatprep.subr.mxu0 0.0
        %1865 = vmatpush1.msra.mxu0 0.0
        %1866 = vmatprep.subr.mxu0 0.0
        %1867 = vmatpush1.msra.mxu0 0.0
        %1868 = vmatprep.subr.mxu0 0.0
        %1869 = vmatpush1.msra.mxu0 0.0
        %1870 = vmatprep.subr.mxu0 0.0
        %1871 = vmatpush1.msra.mxu0 0.0
        %1872 = vmatprep.subr.mxu0 0.0
        %1873 = vmatpush1.msra.mxu0 0.0
        %1874 = vmatprep.subr.mxu0 0.0
        %1875 = vmatpush1.msra.mxu0 0.0
        %1876 = vmatprep.subr.mxu0 0.0
        %1877 = vmatpush1.msra.mxu0 0.0
        %1878 = vmatprep.subr.mxu0 0.0
        %1879 = vmatpush1.msra.mxu0 0.0
        %1880 = vmatprep.subr.mxu0 0.0
        %1881 = vmatpush1.msra.mxu0 0.0
        %1882 = vmatprep.subr.mxu0 0.0
        %1883 = vmatpush1.msra.mxu0 0.0
        %1884 = vmatprep.subr.mxu0 0.0
        %1885 = vmatpush1.msra.mxu0 0.0
        %1886 = vmatprep.subr.mxu0 0.0
        %1887 = vmatpush1.msra.mxu0 0.0
        %1888 = vmatprep.subr.mxu0 0.0
        %1889 = vmatpush1.msra.mxu0 0.0
        %1890 = vmatprep.subr.mxu0 0.0
        %1891 = vmatpush1.msra.mxu0 0.0
        %1892 = vmatprep.subr.mxu0 0.0
        %1893 = vmatpush1.msra.mxu0 0.0
        %1894 = vmatprep.subr.mxu0 0.0
        %1895 = vmatpush1.msra.mxu0 0.0
        %1896 = vmatprep.subr.mxu0 0.0
        %1897 = vmatpush1.msra.mxu0 0.0
        %1898 = vmatprep.subr.mxu0 0.0
        %1899 = vmatpush1.msra.mxu0 0.0
        %1900 = vmatprep.subr.mxu0 0.0
        %1901 = vmatpush1.msra.mxu0 0.0
        %1902 = vmatprep.subr.mxu0 0.0
        %1903 = vmatpush1.msra.mxu0 0.0
        %1904 = vmatprep.subr.mxu0 0.0
        %1905 = vmatpush1.msra.mxu0 0.0
        %1906 = vmatprep.subr.mxu0 0.0
        %1907 = vmatpush1.msra.mxu0 0.0
        %1908 = vmatprep.subr.mxu0 0.0
        %1909 = vmatpush1.msra.mxu0 0.0
        %1910 = vmatprep.subr.mxu0 0.0
        %1911 = vmatpush1.msra.mxu0 0.0
        %1912 = vmatprep.subr.mxu0 0.0
        %1913 = vmatpush1.msra.mxu0 0.0
        %1914 = vmatprep.subr.mxu0 0.0
        %1915 = vmatpush1.msra.mxu0 0.0
        %1916 = vmatprep.subr.mxu0 0.0
        %1917 = vmatpush1.msra.mxu0 0.0
        %1918 = vmatprep.subr.mxu0 0.0
        %1919 = vmatpush1.msra.mxu0 0.0
        %1920 = vmatprep.mubr.f32.mxu0 0.0
        %1921 = vmatmul.mubr.f32.gmra.mrb[0].mxu0 %v1854
        %v1922 = vpop.f32.mrb[0].mxu0
        %v1923 = vadd.f32 0.0, %v1922
        %v1924 = vpop.f32.mrb[0].mxu0
        %1925 = vdwg.mxu0
        %v1926 = vadd.f32 %v1848, %v1923
        %s1927 = scalar_lea.vmem %s5, 24
        %v1928 = vld [vmem:[%s1927] sm:$0xff]
        %v1930 = vsel %vm897, %v1928, 0
        %1932 = vmatprep.subr.mxu0 0.0
        %1933 = vmatpush1.msra.mxu0 %v1673
        %1934 = vmatprep.subr.mxu0 0.0
        %1935 = vmatpush1.msra.mxu0 %v1681
        %1936 = vmatprep.subr.mxu0 0.0
        %1937 = vmatpush1.msra.mxu0 %v1689
        %1938 = vmatprep.subr.mxu0 0.0
        %1939 = vmatpush1.msra.mxu0 %v1697
        %1940 = vmatprep.subr.mxu0 0.0
        %1941 = vmatpush1.msra.mxu0 0.0
        %1942 = vmatprep.subr.mxu0 0.0
        %1943 = vmatpush1.msra.mxu0 0.0
        %1944 = vmatprep.subr.mxu0 0.0
        %1945 = vmatpush1.msra.mxu0 0.0
        %1946 = vmatprep.subr.mxu0 0.0
        %1947 = vmatpush1.msra.mxu0 0.0
        %1948 = vmatprep.subr.mxu0 0.0
        %1949 = vmatpush1.msra.mxu0 0.0
        %1950 = vmatprep.subr.mxu0 0.0
        %1951 = vmatpush1.msra.mxu0 0.0
        %1952 = vmatprep.subr.mxu0 0.0
        %1953 = vmatpush1.msra.mxu0 0.0
        %1954 = vmatprep.subr.mxu0 0.0
        %1955 = vmatpush1.msra.mxu0 0.0
        %1956 = vmatprep.subr.mxu0 0.0
        %1957 = vmatpush1.msra.mxu0 0.0
        %1958 = vmatprep.subr.mxu0 0.0
        %1959 = vmatpush1.msra.mxu0 0.0
        %1960 = vmatprep.subr.mxu0 0.0
        %1961 = vmatpush1.msra.mxu0 0.0
        %1962 = vmatprep.subr.mxu0 0.0
        %1963 = vmatpush1.msra.mxu0 0.0
        %1964 = vmatprep.subr.mxu0 0.0
        %1965 = vmatpush1.msra.mxu0 0.0
        %1966 = vmatprep.subr.mxu0 0.0
        %1967 = vmatpush1.msra.mxu0 0.0
        %1968 = vmatprep.subr.mxu0 0.0
        %1969 = vmatpush1.msra.mxu0 0.0
        %1970 = vmatprep.subr.mxu0 0.0
        %1971 = vmatpush1.msra.mxu0 0.0
        %1972 = vmatprep.subr.mxu0 0.0
        %1973 = vmatpush1.msra.mxu0 0.0
        %1974 = vmatprep.subr.mxu0 0.0
        %1975 = vmatpush1.msra.mxu0 0.0
        %1976 = vmatprep.subr.mxu0 0.0
        %1977 = vmatpush1.msra.mxu0 0.0
        %1978 = vmatprep.subr.mxu0 0.0
        %1979 = vmatpush1.msra.mxu0 0.0
        %1980 = vmatprep.subr.mxu0 0.0
        %1981 = vmatpush1.msra.mxu0 0.0
        %1982 = vmatprep.subr.mxu0 0.0
        %1983 = vmatpush1.msra.mxu0 0.0
        %1984 = vmatprep.subr.mxu0 0.0
        %1985 = vmatpush1.msra.mxu0 0.0
        %1986 = vmatprep.subr.mxu0 0.0
        %1987 = vmatpush1.msra.mxu0 0.0
        %1988 = vmatprep.subr.mxu0 0.0
        %1989 = vmatpush1.msra.mxu0 0.0
        %1990 = vmatprep.subr.mxu0 0.0
        %1991 = vmatpush1.msra.mxu0 0.0
        %1992 = vmatprep.subr.mxu0 0.0
        %1993 = vmatpush1.msra.mxu0 0.0
        %1994 = vmatprep.subr.mxu0 0.0
        %1995 = vmatpush1.msra.mxu0 0.0
        %1996 = vmatprep.mubr.f32.mxu0 0.0
        %1997 = vmatmul.mubr.f32.gmra.mrb[0].mxu0 %v1930
        %v1998 = vpop.f32.mrb[0].mxu0
        %v1999 = vadd.f32 0.0, %v1998
        %v2000 = vpop.f32.mrb[0].mxu0
        %2001 = vdwg.mxu0
        %v2002 = vadd.f32 %v1926, %v1999
        %s2003 = scalar_lea.vmem %s5, 32
        %v2004 = vld [vmem:[%s2003] sm:$0xff]
        %v2006 = vsel %vm897, %v2004, 0
        %2008 = vmatprep.subr.mxu0 0.0
        %2009 = vmatpush1.msra.mxu0 %v1674
        %2010 = vmatprep.subr.mxu0 0.0
        %2011 = vmatpush1.msra.mxu0 %v1682
        %2012 = vmatprep.subr.mxu0 0.0
        %2013 = vmatpush1.msra.mxu0 %v1690
        %2014 = vmatprep.subr.mxu0 0.0
        %2015 = vmatpush1.msra.mxu0 %v1698
        %2016 = vmatprep.subr.mxu0 0.0
        %2017 = vmatpush1.msra.mxu0 0.0
        %2018 = vmatprep.subr.mxu0 0.0
        %2019 = vmatpush1.msra.mxu0 0.0
        %2020 = vmatprep.subr.mxu0 0.0
        %2021 = vmatpush1.msra.mxu0 0.0
        %2022 = vmatprep.subr.mxu0 0.0
        %2023 = vmatpush1.msra.mxu0 0.0
        %2024 = vmatprep.subr.mxu0 0.0
        %2025 = vmatpush1.msra.mxu0 0.0
        %2026 = vmatprep.subr.mxu0 0.0
        %2027 = vmatpush1.msra.mxu0 0.0
        %2028 = vmatprep.subr.mxu0 0.0
        %2029 = vmatpush1.msra.mxu0 0.0
        %2030 = vmatprep.subr.mxu0 0.0
        %2031 = vmatpush1.msra.mxu0 0.0
        %2032 = vmatprep.subr.mxu0 0.0
        %2033 = vmatpush1.msra.mxu0 0.0
        %2034 = vmatprep.subr.mxu0 0.0
        %2035 = vmatpush1.msra.mxu0 0.0
        %2036 = vmatprep.subr.mxu0 0.0
        %2037 = vmatpush1.msra.mxu0 0.0
        %2038 = vmatprep.subr.mxu0 0.0
        %2039 = vmatpush1.msra.mxu0 0.0
        %2040 = vmatprep.subr.mxu0 0.0
        %2041 = vmatpush1.msra.mxu0 0.0
        %2042 = vmatprep.subr.mxu0 0.0
        %2043 = vmatpush1.msra.mxu0 0.0
        %2044 = vmatprep.subr.mxu0 0.0
        %2045 = vmatpush1.msra.mxu0 0.0
        %2046 = vmatprep.subr.mxu0 0.0
        %2047 = vmatpush1.msra.mxu0 0.0
        %2048 = vmatprep.subr.mxu0 0.0
        %2049 = vmatpush1.msra.mxu0 0.0
        %2050 = vmatprep.subr.mxu0 0.0
        %2051 = vmatpush1.msra.mxu0 0.0
        %2052 = vmatprep.subr.mxu0 0.0
        %2053 = vmatpush1.msra.mxu0 0.0
        %2054 = vmatprep.subr.mxu0 0.0
        %2055 = vmatpush1.msra.mxu0 0.0
        %2056 = vmatprep.subr.mxu0 0.0
        %2057 = vmatpush1.msra.mxu0 0.0
        %2058 = vmatprep.subr.mxu0 0.0
        %2059 = vmatpush1.msra.mxu0 0.0
        %2060 = vmatprep.subr.mxu0 0.0
        %2061 = vmatpush1.msra.mxu0 0.0
        %2062 = vmatprep.subr.mxu0 0.0
        %2063 = vmatpush1.msra.mxu0 0.0
        %2064 = vmatprep.subr.mxu0 0.0
        %2065 = vmatpush1.msra.mxu0 0.0
        %2066 = vmatprep.subr.mxu0 0.0
        %2067 = vmatpush1.msra.mxu0 0.0
        %2068 = vmatprep.subr.mxu0 0.0
        %2069 = vmatpush1.msra.mxu0 0.0
        %2070 = vmatprep.subr.mxu0 0.0
        %2071 = vmatpush1.msra.mxu0 0.0
        %2072 = vmatprep.mubr.f32.mxu0 0.0
        %2073 = vmatmul.mubr.f32.gmra.mrb[0].mxu0 %v2006
        %v2074 = vpop.f32.mrb[0].mxu0
        %v2075 = vadd.f32 0.0, %v2074
        %v2076 = vpop.f32.mrb[0].mxu0
        %2077 = vdwg.mxu0
        %v2078 = vadd.f32 %v2002, %v2075
        %s2079 = scalar_lea.vmem %s5, 40
        %v2080 = vld [vmem:[%s2079] sm:$0xff]
        %v2082 = vsel %vm897, %v2080, 0
        %2084 = vmatprep.subr.mxu0 0.0
        %2085 = vmatpush1.msra.mxu0 %v1675
        %2086 = vmatprep.subr.mxu0 0.0
        %2087 = vmatpush1.msra.mxu0 %v1683
        %2088 = vmatprep.subr.mxu0 0.0
        %2089 = vmatpush1.msra.mxu0 %v1691
        %2090 = vmatprep.subr.mxu0 0.0
        %2091 = vmatpush1.msra.mxu0 %v1699
        %2092 = vmatprep.subr.mxu0 0.0
        %2093 = vmatpush1.msra.mxu0 0.0
        %2094 = vmatprep.subr.mxu0 0.0
        %2095 = vmatpush1.msra.mxu0 0.0
        %2096 = vmatprep.subr.mxu0 0.0
        %2097 = vmatpush1.msra.mxu0 0.0
        %2098 = vmatprep.subr.mxu0 0.0
        %2099 = vmatpush1.msra.mxu0 0.0
        %2100 = vmatprep.subr.mxu0 0.0
        %2101 = vmatpush1.msra.mxu0 0.0
        %2102 = vmatprep.subr.mxu0 0.0
        %2103 = vmatpush1.msra.mxu0 0.0
        %2104 = vmatprep.subr.mxu0 0.0
        %2105 = vmatpush1.msra.mxu0 0.0
        %2106 = vmatprep.subr.mxu0 0.0
        %2107 = vmatpush1.msra.mxu0 0.0
        %2108 = vmatprep.subr.mxu0 0.0
        %2109 = vmatpush1.msra.mxu0 0.0
        %2110 = vmatprep.subr.mxu0 0.0
        %2111 = vmatpush1.msra.mxu0 0.0
        %2112 = vmatprep.subr.mxu0 0.0
        %2113 = vmatpush1.msra.mxu0 0.0
        %2114 = vmatprep.subr.mxu0 0.0
        %2115 = vmatpush1.msra.mxu0 0.0
        %2116 = vmatprep.subr.mxu0 0.0
        %2117 = vmatpush1.msra.mxu0 0.0
        %2118 = vmatprep.subr.mxu0 0.0
        %2119 = vmatpush1.msra.mxu0 0.0
        %2120 = vmatprep.subr.mxu0 0.0
        %2121 = vmatpush1.msra.mxu0 0.0
        %2122 = vmatprep.subr.mxu0 0.0
        %2123 = vmatpush1.msra.mxu0 0.0
        %2124 = vmatprep.subr.mxu0 0.0
        %2125 = vmatpush1.msra.mxu0 0.0
        %2126 = vmatprep.subr.mxu0 0.0
        %2127 = vmatpush1.msra.mxu0 0.0
        %2128 = vmatprep.subr.mxu0 0.0
        %2129 = vmatpush1.msra.mxu0 0.0
        %2130 = vmatprep.subr.mxu0 0.0
        %2131 = vmatpush1.msra.mxu0 0.0
        %2132 = vmatprep.subr.mxu0 0.0
        %2133 = vmatpush1.msra.mxu0 0.0
        %2134 = vmatprep.subr.mxu0 0.0
        %2135 = vmatpush1.msra.mxu0 0.0
        %2136 = vmatprep.subr.mxu0 0.0
        %2137 = vmatpush1.msra.mxu0 0.0
        %2138 = vmatprep.subr.mxu0 0.0
        %2139 = vmatpush1.msra.mxu0 0.0
        %2140 = vmatprep.subr.mxu0 0.0
        %2141 = vmatpush1.msra.mxu0 0.0
        %2142 = vmatprep.subr.mxu0 0.0
        %2143 = vmatpush1.msra.mxu0 0.0
        %2144 = vmatprep.subr.mxu0 0.0
        %2145 = vmatpush1.msra.mxu0 0.0
        %2146 = vmatprep.subr.mxu0 0.0
        %2147 = vmatpush1.msra.mxu0 0.0
        %2148 = vmatprep.mubr.f32.mxu0 0.0
        %2149 = vmatmul.mubr.f32.gmra.mrb[0].mxu0 %v2082
        %v2150 = vpop.f32.mrb[0].mxu0
        %v2151 = vadd.f32 0.0, %v2150
        %v2152 = vpop.f32.mrb[0].mxu0
        %2153 = vdwg.mxu0
        %v2154 = vadd.f32 %v2078, %v2151
        %s2155 = scalar_lea.vmem %s5, 48
        %v2156 = vld [vmem:[%s2155] sm:$0xff]
        %v2158 = vsel %vm897, %v2156, 0
        %2160 = vmatprep.subr.mxu0 0.0
        %2161 = vmatpush1.msra.mxu0 %v1676
        %2162 = vmatprep.subr.mxu0 0.0
        %2163 = vmatpush1.msra.mxu0 %v1684
        %2164 = vmatprep.subr.mxu0 0.0
        %2165 = vmatpush1.msra.mxu0 %v1692
        %2166 = vmatprep.subr.mxu0 0.0
        %2167 = vmatpush1.msra.mxu0 %v1700
        %2168 = vmatprep.subr.mxu0 0.0
        %2169 = vmatpush1.msra.mxu0 0.0
        %2170 = vmatprep.subr.mxu0 0.0
        %2171 = vmatpush1.msra.mxu0 0.0
        %2172 = vmatprep.subr.mxu0 0.0
        %2173 = vmatpush1.msra.mxu0 0.0
        %2174 = vmatprep.subr.mxu0 0.0
        %2175 = vmatpush1.msra.mxu0 0.0
        %2176 = vmatprep.subr.mxu0 0.0
        %2177 = vmatpush1.msra.mxu0 0.0
        %2178 = vmatprep.subr.mxu0 0.0
        %2179 = vmatpush1.msra.mxu0 0.0
        %2180 = vmatprep.subr.mxu0 0.0
        %2181 = vmatpush1.msra.mxu0 0.0
        %2182 = vmatprep.subr.mxu0 0.0
        %2183 = vmatpush1.msra.mxu0 0.0
        %2184 = vmatprep.subr.mxu0 0.0
        %2185 = vmatpush1.msra.mxu0 0.0
        %2186 = vmatprep.subr.mxu0 0.0
        %2187 = vmatpush1.msra.mxu0 0.0
        %2188 = vmatprep.subr.mxu0 0.0
        %2189 = vmatpush1.msra.mxu0 0.0
        %2190 = vmatprep.subr.mxu0 0.0
        %2191 = vmatpush1.msra.mxu0 0.0
        %2192 = vmatprep.subr.mxu0 0.0
        %2193 = vmatpush1.msra.mxu0 0.0
        %2194 = vmatprep.subr.mxu0 0.0
        %2195 = vmatpush1.msra.mxu0 0.0
        %2196 = vmatprep.subr.mxu0 0.0
        %2197 = vmatpush1.msra.mxu0 0.0
        %2198 = vmatprep.subr.mxu0 0.0
        %2199 = vmatpush1.msra.mxu0 0.0
        %2200 = vmatprep.subr.mxu0 0.0
        %2201 = vmatpush1.msra.mxu0 0.0
        %2202 = vmatprep.subr.mxu0 0.0
        %2203 = vmatpush1.msra.mxu0 0.0
        %2204 = vmatprep.subr.mxu0 0.0
        %2205 = vmatpush1.msra.mxu0 0.0
        %2206 = vmatprep.subr.mxu0 0.0
        %2207 = vmatpush1.msra.mxu0 0.0
        %2208 = vmatprep.subr.mxu0 0.0
        %2209 = vmatpush1.msra.mxu0 0.0
        %2210 = vmatprep.subr.mxu0 0.0
        %2211 = vmatpush1.msra.mxu0 0.0
        %2212 = vmatprep.subr.mxu0 0.0
        %2213 = vmatpush1.msra.mxu0 0.0
        %2214 = vmatprep.subr.mxu0 0.0
        %2215 = vmatpush1.msra.mxu0 0.0
        %2216 = vmatprep.subr.mxu0 0.0
        %2217 = vmatpush1.msra.mxu0 0.0
        %2218 = vmatprep.subr.mxu0 0.0
        %2219 = vmatpush1.msra.mxu0 0.0
        %2220 = vmatprep.subr.mxu0 0.0
        %2221 = vmatpush1.msra.mxu0 0.0
        %2222 = vmatprep.subr.mxu0 0.0
        %2223 = vmatpush1.msra.mxu0 0.0
        %2224 = vmatprep.mubr.f32.mxu0 0.0
        %2225 = vmatmul.mubr.f32.gmra.mrb[0].mxu0 %v2158
        %v2226 = vpop.f32.mrb[0].mxu0
        %v2227 = vadd.f32 0.0, %v2226
        %v2228 = vpop.f32.mrb[0].mxu0
        %2229 = vdwg.mxu0
        %v2230 = vadd.f32 %v2154, %v2227
        %s2231 = scalar_lea.vmem %s5, 56
        %v2232 = vld [vmem:[%s2231] sm:$0xff]
        %v2234 = vsel %vm897, %v2232, 0
        %2236 = vmatprep.subr.mxu0 0.0
        %2237 = vmatpush1.msra.mxu0 %v1677
        %2238 = vmatprep.subr.mxu0 0.0
        %2239 = vmatpush1.msra.mxu0 %v1685
        %2240 = vmatprep.subr.mxu0 0.0
        %2241 = vmatpush1.msra.mxu0 %v1693
        %2242 = vmatprep.subr.mxu0 0.0
        %2243 = vmatpush1.msra.mxu0 %v1701
        %2244 = vmatprep.subr.mxu0 0.0
        %2245 = vmatpush1.msra.mxu0 0.0
        %2246 = vmatprep.subr.mxu0 0.0
        %2247 = vmatpush1.msra.mxu0 0.0
        %2248 = vmatprep.subr.mxu0 0.0
        %2249 = vmatpush1.msra.mxu0 0.0
        %2250 = vmatprep.subr.mxu0 0.0
        %2251 = vmatpush1.msra.mxu0 0.0
        %2252 = vmatprep.subr.mxu0 0.0
        %2253 = vmatpush1.msra.mxu0 0.0
        %2254 = vmatprep.subr.mxu0 0.0
        %2255 = vmatpush1.msra.mxu0 0.0
        %2256 = vmatprep.subr.mxu0 0.0
        %2257 = vmatpush1.msra.mxu0 0.0
        %2258 = vmatprep.subr.mxu0 0.0
        %2259 = vmatpush1.msra.mxu0 0.0
        %2260 = vmatprep.subr.mxu0 0.0
        %2261 = vmatpush1.msra.mxu0 0.0
        %2262 = vmatprep.subr.mxu0 0.0
        %2263 = vmatpush1.msra.mxu0 0.0
        %2264 = vmatprep.subr.mxu0 0.0
        %2265 = vmatpush1.msra.mxu0 0.0
        %2266 = vmatprep.subr.mxu0 0.0
        %2267 = vmatpush1.msra.mxu0 0.0
        %2268 = vmatprep.subr.mxu0 0.0
        %2269 = vmatpush1.msra.mxu0 0.0
        %2270 = vmatprep.subr.mxu0 0.0
        %2271 = vmatpush1.msra.mxu0 0.0
        %2272 = vmatprep.subr.mxu0 0.0
        %2273 = vmatpush1.msra.mxu0 0.0
        %2274 = vmatprep.subr.mxu0 0.0
        %2275 = vmatpush1.msra.mxu0 0.0
        %2276 = vmatprep.subr.mxu0 0.0
        %2277 = vmatpush1.msra.mxu0 0.0
        %2278 = vmatprep.subr.mxu0 0.0
        %2279 = vmatpush1.msra.mxu0 0.0
        %2280 = vmatprep.subr.mxu0 0.0
        %2281 = vmatpush1.msra.mxu0 0.0
        %2282 = vmatprep.subr.mxu0 0.0
        %2283 = vmatpush1.msra.mxu0 0.0
        %2284 = vmatprep.subr.mxu0 0.0
        %2285 = vmatpush1.msra.mxu0 0.0
        %2286 = vmatprep.subr.mxu0 0.0
        %2287 = vmatpush1.msra.mxu0 0.0
        %2288 = vmatprep.subr.mxu0 0.0
        %2289 = vmatpush1.msra.mxu0 0.0
        %2290 = vmatprep.subr.mxu0 0.0
        %2291 = vmatpush1.msra.mxu0 0.0
        %2292 = vmatprep.subr.mxu0 0.0
        %2293 = vmatpush1.msra.mxu0 0.0
        %2294 = vmatprep.subr.mxu0 0.0
        %2295 = vmatpush1.msra.mxu0 0.0
        %2296 = vmatprep.subr.mxu0 0.0
        %2297 = vmatpush1.msra.mxu0 0.0
        %2298 = vmatprep.subr.mxu0 0.0
        %2299 = vmatpush1.msra.mxu0 0.0
        %2300 = vmatprep.mubr.f32.mxu0 0.0
        %2301 = vmatmul.mubr.f32.gmra.mrb[0].mxu0 %v2234
        %v2302 = vpop.f32.mrb[0].mxu0
        %v2303 = vadd.f32 0.0, %v2302
        %v2304 = vpop.f32.mrb[0].mxu0
        %2305 = vdwg.mxu0
        %v2306 = vadd.f32 %v2230, %v2303
        %v2307 = vmax.f32 %v2306, 0.0
        %v2308 = vand.u32 2147483647, %v2307
        %s2309 = sld [smem:[#allocation13]]
        %s2310 = sld [smem:[#allocation12]]
        %v2311 = vstv %s2310
        %v2312 = vadd.f32 %v2308, %v2311
        %v2313 = vrcp.pop %v2312
        %v2314 = vstv %s2309
        %v2315 = vmul.f32 %v2314, %v2313
        %v2316 = vadd.f32 %v2315, 0.0
        %s2317 = sld [smem:[#allocation13 + $0x1]]
        %s2318 = sld [smem:[#allocation12 + $0x1]]
        %v2319 = vstv %s2318
        %v2320 = vadd.f32 %v2308, %v2319
        %v2321 = vrcp.pop %v2320
        %v2322 = vstv %s2317
        %v2323 = vmul.f32 %v2322, %v2321
        %v2324 = vadd.f32 %v2316, %v2323
        %s2325 = sld [smem:[#allocation13 + $0x2]]
        %s2326 = sld [smem:[#allocation12 + $0x2]]
        %v2327 = vstv %s2326
        %v2328 = vadd.f32 %v2308, %v2327
        %v2329 = vrcp.pop %v2328
        %v2330 = vstv %s2325
        %v2331 = vmul.f32 %v2330, %v2329
        %v2332 = vadd.f32 %v2324, %v2331
        %s2333 = sld [smem:[#allocation13 + $0x3]]
        %s2334 = sld [smem:[#allocation12 + $0x3]]
        %v2335 = vstv %s2334
        %v2336 = vadd.f32 %v2308, %v2335
        %v2337 = vrcp.pop %v2336
        %v2338 = vstv %s2333
        %v2339 = vmul.f32 %v2338, %v2337
        %v2340 = vadd.f32 %v2332, %v2339
        %s2341 = sld [smem:[#allocation13 + $0x4]]
        %s2342 = sld [smem:[#allocation12 + $0x4]]
        %v2343 = vstv %s2342
        %v2344 = vadd.f32 %v2308, %v2343
        %v2345 = vrcp.pop %v2344
        %v2346 = vstv %s2341
        %v2347 = vmul.f32 %v2346, %v2345
        %v2348 = vadd.f32 %v2340, %v2347
        %s2349 = sld [smem:[#allocation13 + $0x5]]
        %s2350 = sld [smem:[#allocation12 + $0x5]]
        %v2351 = vstv %s2350
        %v2352 = vadd.f32 %v2308, %v2351
        %v2353 = vrcp.pop %v2352
        %v2354 = vstv %s2349
        %v2355 = vmul.f32 %v2354, %v2353
        %v2356 = vadd.f32 %v2348, %v2355
        %s2357 = sld [smem:[#allocation13 + $0x6]]
        %s2358 = sld [smem:[#allocation12 + $0x6]]
        %v2359 = vstv %s2358
        %v2360 = vadd.f32 %v2308, %v2359
        %v2361 = vrcp.pop %v2360
        %v2362 = vstv %s2357
        %v2363 = vmul.f32 %v2362, %v2361
        %v2364 = vadd.f32 %v2356, %v2363
        %s2365 = sld [smem:[#allocation13 + $0x7]]
        %s2366 = sld [smem:[#allocation12 + $0x7]]
        %v2367 = vstv %s2366
        %v2368 = vadd.f32 %v2308, %v2367
        %v2369 = vrcp.pop %v2368
        %v2370 = vstv %s2365
        %v2371 = vmul.f32 %v2370, %v2369
        %v2372 = vadd.f32 %v2364, %v2371
        %s2373 = sld [smem:[#allocation13 + $0x8]]
        %s2374 = sld [smem:[#allocation12 + $0x8]]
        %v2375 = vstv %s2374
        %v2376 = vadd.f32 %v2308, %v2375
        %v2377 = vrcp.pop %v2376
        %v2378 = vstv %s2373
        %v2379 = vmul.f32 %v2378, %v2377
        %v2380 = vadd.f32 %v2372, %v2379
        %s2381 = sld [smem:[#allocation13 + $0x9]]
        %s2382 = sld [smem:[#allocation12 + $0x9]]
        %v2383 = vstv %s2382
        %v2384 = vadd.f32 %v2308, %v2383
        %v2385 = vrcp.pop %v2384
        %v2386 = vstv %s2381
        %v2387 = vmul.f32 %v2386, %v2385
        %v2388 = vadd.f32 %v2380, %v2387
        %v2389 = vld [vmem:[%s360] sm:$0xff]
        %v2390 = vadd.f32 %v2388, %v2389
        %2391 = vst [vmem:[%s414] sm:$0xff] %v2390
        %s2392 = sand.u32 %s217, 1
        %s2393 = scalar_lea.sflag [#allocation5], %s2392
        %s2394 = sand.u32 %s217, 1
        %s2395 = smul.addr %s2394, 8
        %s2396 = scalar_lea.vmem [#allocation15], %s2395
        // Predicated region
        $region77: #{tpu_custom_call.1} parent=51 // pred_check
          %p2397 = pneg %p227
        $region78: #{tpu_custom_call.1} parent=51 // pred_check_branch
          %2399 = sbr.rel (%p2397) target = $region80
        $region79: #{tpu_custom_call.1} parent=51 // pred_region
          %s2401 = ssub.s32 128, 128
          %2402 = vsyncadd %s2393, %s2401
          %s2403 = smul.addr %s31, 128
          %s2404 = scalar_lea.hbm %s8, %s2403
          %s2406 = sshll.u32 %s2396, 4
          %s2407 = int_to_ptr.vmem [resolvable:$true] %s2406
          %2409 = dma.vmem_to_hbm [thread:$0]  %s2407, 128, %s2404, %s2393
        $region80: #{tpu_custom_call.1} parent=51 // pred_fallthru
          _
      $region52: #{tpu_custom_call.1} parent=5 // pred_fallthru
        _
      %p2410 = scmp.le.s32.totalorder 2, %s26
      // Predicated region
      $region81: #{tpu_custom_call.1} parent=5 // pred_check
        %p2411 = pneg %p2410
      $region82: #{tpu_custom_call.1} parent=5 // pred_check_branch
        %2413 = sbr.rel (%p2411) target = $region84
      $region83: #{tpu_custom_call.1} parent=5 // pred_region
        %s2414 = ssub.s32 %s26, 2
        // Predicated region
        $region85: #{tpu_custom_call.1} parent=83 // pred_check
          %p2415 = pneg %p233
        $region86: #{tpu_custom_call.1} parent=83 // pred_check_branch
          %2417 = sbr.rel (%p2415) target = $region88
        $region87: #{tpu_custom_call.1} parent=83 // pred_region
          %s2418 = sand.u32 %s218, 1
          %s2419 = scalar_lea.sflag [#allocation5], %s2418
          %s2420 = sand.u32 %s218, 1
          %s2421 = smul.addr %s2420, 8
          %s2422 = scalar_lea.vmem [#allocation15], %s2421
          %2423 = dma.done %s2419, 128
        $region88: #{tpu_custom_call.1} parent=83 // pred_fallthru
          _
      $region84: #{tpu_custom_call.1} parent=5 // pred_fallthru
        _
    $region6: #{tpu_custom_call.1} parent=1 // loop_footer
      %s30 = sadd.s32 1, %s26
    $region7: #{tpu_custom_call.1} parent=1 // loop_footer_branch
      %25 = sbr.rel target = $region3
    $region8: #{tpu_custom_call.1} parent=1 // loop_exit
      _
    %2424 = vsyncpa [#allocation4], 1
    %s2425 = scalar_lea.sflag [#allocation4], 1
    %2426 = vsyncpa %s2425, 1
    %2427 = vsyncpa [#allocation8], 1
    %s2428 = scalar_lea.sflag [#allocation8], 1
    %2429 = vsyncpa %s2428, 1
    %2430 = vsyncpa [#allocation11], 1
    %2431 = vsyncpa [#allocation5], 1
    %s2432 = scalar_lea.sflag [#allocation5], 1
    %2433 = vsyncpa %s2432, 1
    %2434 = vsyncpa [#allocation6], 1
    %s2435 = scalar_lea.sflag [#allocation6], 1
    %2436 = vsyncpa %s2435, 1
    %2437 = vsyncpa [#allocation14], 1

</llo_original>
